<compile_context>
chip_gen: v7x
topology: tpu7x:2x2x1
jax: 0.10.0
libtpu: 0.0.40
codegen_flags: <defaults>
</compile_context>

<pallas_src>
import functools
import math

import jax
import jax.numpy as jnp
from jax.experimental import pallas as pl
from jax.experimental.pallas import tpu as pltpu

_F32 = jnp.float32


# ----------------------------------------------------------------------------
# GroupNorm(H, D) over the last dim of y [N, D] (f32 in / f32 out)
# ----------------------------------------------------------------------------
def _group_norm(y, gamma, beta, g_ref, *, num_heads, mm_dtype, use_gn_matmul):
    if use_gn_matmul:
        # Lane-dense path (Dh not a lane-tile multiple): per-element group mean via
        # one [N,D]@[D,D] bf16 MXU matmul with G = kron(I_H, ones(Dh,Dh)/Dh).
        g = g_ref[...]
        mu = jnp.dot(y.astype(mm_dtype), g, preferred_element_type=_F32)
        yc = y - mu
        var = jnp.dot(jnp.square(yc).astype(mm_dtype), g, preferred_element_type=_F32)
        yn = yc * jax.lax.rsqrt(jnp.maximum(var, 0.0) + 1e-5)
    else:
        # Dh % 128 == 0: the lane split is tile-aligned (free); one-pass stats.
        n, d = y.shape
        dh = d // num_heads
        yg = y.reshape(n, num_heads, dh)
        mu = jnp.mean(yg, axis=-1, keepdims=True)
        var = jnp.mean(jnp.square(yg), axis=-1, keepdims=True) - jnp.square(mu)
        yn = ((yg - mu) * jax.lax.rsqrt(jnp.maximum(var, 0.0) + 1e-5)).reshape(n, d)
    return yn * gamma + beta


# ----------------------------------------------------------------------------
# in_proj branch = Linear(D,D) -> CELU(1.3) -> GroupNorm(H, D); rows independent
# ----------------------------------------------------------------------------
def _in_proj(x, w_in, b_in, gamma, beta, g_ref, *, num_heads, mm_dtype,
             use_gn_matmul):
    y = jnp.dot(x.astype(mm_dtype), w_in, preferred_element_type=_F32) + b_in
    alpha = 1.3
    inv_alpha = 1.0 / alpha                                  # trace-time const (no VPU divide)
    y = jnp.where(y > 0.0, y,
                  alpha * (jnp.exp(jnp.minimum(y, 0.0) * inv_alpha) - 1.0))
    return _group_norm(y, gamma, beta, g_ref, num_heads=num_heads,
                       mm_dtype=mm_dtype, use_gn_matmul=use_gn_matmul)


# ----------------------------------------------------------------------------
# Fully fused forward for one batch element (one grid step)
# ----------------------------------------------------------------------------
def _lowrank_kernel(q_ref, k_ref, v2_ref, m_ref,
                    w_in_ref, wb_bd_ref, bb_ref, wse_ref, wl2_ref,
                    wba_ref, wbq_ref, w1_ref, w2_ref, vecs_ref,
                    *rest, num_heads, mm_dtype, use_gn_matmul):
    if use_gn_matmul:
        g_ref, o_ref = rest
    else:
        g_ref = None
        (o_ref,) = rest

    _, M, D = q_ref.shape

    # Packed small params ([9, D] f32): one DMA instead of nine.
    b_in = vecs_ref[0:1, :]
    gn_w = vecs_ref[1:2, :]
    gn_b = vecs_ref[2:3, :]
    bl2  = vecs_ref[3:4, :]
    bbi  = vecs_ref[4:5, :]
    lnw  = vecs_ref[5:6, :]
    lnb  = vecs_ref[6:7, :]
    b1   = vecs_ref[7:8, :]
    b2   = vecs_ref[8:9, :]

    query = q_ref[0]                                         # [M, D]  (bf16 ok)
    mask = m_ref[0]                                          # [M, 1]  f32, 1 = valid
    query_f32 = query.astype(_F32)

    proj = functools.partial(_in_proj, w_in=w_in_ref[...], b_in=b_in,
                             gamma=gn_w, beta=gn_b, g_ref=g_ref,
                             num_heads=num_heads, mm_dtype=mm_dtype,
                             use_gn_matmul=use_gn_matmul)

    # ---- global query: masked mean over the sequence -------------------------
    msum = jnp.sum(mask, axis=0, keepdims=True)              # [1, 1]
    inv_msum = pl.reciprocal(jnp.maximum(msum, 1e-6), approx=True)
    gq = jnp.sum(query_f32 * mask, axis=0, keepdims=True) * inv_msum      # [1, D]

    # ---- shared in_proj (clones() -> identical weights at init) --------------
    k_p = proj(k_ref[0])                                     # [M, D]  f32
    v2_p = proj(v2_ref[0])                                   # [M, D]  f32
    q_v1 = proj(gq)                                          # [1, D]  f32 (q == v1)

    # ---- SCAtt (spatial + channel attention), lane-dense ---------------------
    am = q_v1 * k_p                                          # [M, D]  == q.unsqueeze(-2) * k
    h = jnp.dot(am.astype(mm_dtype), wb_bd_ref[...],
                preferred_element_type=_F32) + bb_ref[...]   # [M, D/2]
    h = jnp.maximum(h, 0.0)

    pool = jnp.sum(h * mask, axis=0, keepdims=True) * inv_msum            # [1, D/2]

    # spatial attention: per-head logits replicated across each head's Dh lanes
    # (attention_last bias is constant along the softmax axis -> cancels).
    logits = jnp.dot(h.astype(mm_dtype), wse_ref[...],
                     preferred_element_type=_F32)            # [M, D]
    e = jnp.exp(logits - jnp.max(logits, axis=0, keepdims=True))
    e = e * mask                                             # == masked_fill(-1e9)
    a_sp = e * pl.reciprocal(
        jnp.maximum(jnp.sum(e, axis=0, keepdims=True), 1e-30), approx=True)
    v2w = jnp.sum(a_sp * v2_p, axis=0, keepdims=True)        # [1, D]

    # channel attention (per-head Dh/2 -> Dh block-diag + sigmoid)
    a_ch = jax.nn.sigmoid(
        jnp.dot(pool.astype(mm_dtype), wl2_ref[...],
                preferred_element_type=_F32) + bl2)          # [1, D]

    attn = q_v1 * v2w * a_ch                                 # [1, D]  (value1 == q_v1)

    # ---- tail: bifeat_emb(cat) + residual -> LayerNorm -> FFN ----------------
    # cat([attn.expand, query]) @ W_bif == attn @ W_a (once) + query @ W_q
    t_a = jnp.dot(attn.astype(mm_dtype), wba_ref[...],
                  preferred_element_type=_F32)               # [1, D]
    x = (jnp.dot(query.astype(mm_dtype), wbq_ref[...],
                 preferred_element_type=_F32) + t_a + bbi)
    x = jnp.maximum(x, 0.0) + query_f32                      # ReLU (dropout=id) + residual

    mu = jnp.mean(x, axis=-1, keepdims=True)
    var = jnp.mean(jnp.square(x), axis=-1, keepdims=True) - jnp.square(mu)
    x = (x - mu) * jax.lax.rsqrt(jnp.maximum(var, 0.0) + 1e-5)
    x = x * lnw + lnb

    hdd = jnp.maximum(
        jnp.dot(x.astype(mm_dtype), w1_ref[...],
                preferred_element_type=_F32) + b1, 0.0)
    out = jnp.dot(hdd.astype(mm_dtype), w2_ref[...],
                  preferred_element_type=_F32) + b2
    o_ref[...] = out.reshape(1, M, D).astype(o_ref.dtype)


# ----------------------------------------------------------------------------
# Parameter init (deterministic, synthetic)
# ----------------------------------------------------------------------------
def init_params(key, embed_dim, att_heads):
    D, H = embed_dim, att_heads
    Dh = D // H
    Hd2 = Dh // 2
    ks = jax.random.split(key, 16)
    s = 0.1

    def w(k, shape):
        return jax.random.normal(k, shape, jnp.float32) * s

    return dict(
        # in_proj (shared across the 4 deep copies, matching clones() at init)
        w_in=w(ks[0], (D, D)), b_in=w(ks[1], (1, D)),
        gn_w=jnp.ones((1, D), jnp.float32), gn_b=jnp.zeros((1, D), jnp.float32),
        # SCAtt
        wb=w(ks[2], (Dh, Hd2)), bb=w(ks[3], (1, Hd2)),
        wl=w(ks[4], (1, Hd2)), bl=w(ks[5], (1, 1)),   # bl cancels in softmax (unused)
        wl2=w(ks[6], (Hd2, Dh)), bl2=w(ks[7], (1, Dh)),
        # bifeat_emb (2D -> D) split into attn-half / query-half
        wba=w(ks[8], (D, D)), wbq=w(ks[9], (D, D)), bbi=w(ks[10], (1, D)),
        # LayerNorm
        lnw=jnp.ones((1, D), jnp.float32), lnb=jnp.zeros((1, D), jnp.float32),
        # ff_layer (d_ff == d_model == D in this module)
        w1=w(ks[11], (D, D)), b1=w(ks[12], (1, D)),
        w2=w(ks[13], (D, D)), b2=w(ks[14], (1, D)),
    )


# ----------------------------------------------------------------------------
# Full forward: one fused pallas_call, grid over batch ("parallel")
# ----------------------------------------------------------------------------
def low_rank_forward(params, query, key, value2, mask, num_heads,
                     mm_dtype=jnp.bfloat16):
    """query/key/value2: [B, M, D] (f32 or bf16); mask: [B, 1, M] (1 = valid).

    Output: [B, M, D] in query.dtype (nn.Dropout layers = identity, eval mode).
    """
    p = params
    B, M, D = query.shape
    H = num_heads
    Dh = D // H
    Dhalf = D // 2
    f32 = jnp.float32
    use_gn_matmul = (Dh % 128 != 0)              # lane-dense GroupNorm when Dh < lane tile

    # --- trace-time weight prep (tiny XLA ops) --------------------------------
    eyeH = jnp.eye(H, dtype=f32)
    wb_bd = jnp.kron(eyeH, p['wb']).astype(mm_dtype)             # [D, D/2]  block-diag
    bb_t = jnp.tile(p['bb'], (1, H))                             # [1, D/2]
    wsel = jnp.kron(eyeH, p['wl'].T)                             # [D/2, H]  per-head selector
    hexp = jnp.kron(eyeH, jnp.ones((1, Dh), f32))                # [H, D]    head->lane expand
    wsel_exp = (wsel @ hexp).astype(mm_dtype)                    # [D/2, D]  folded (bf16 MXU)
    wl2_bd = jnp.kron(eyeH, p['wl2']).astype(mm_dtype)           # [D/2, D]  block-diag
    bl2_t = jnp.tile(p['bl2'], (1, H))                           # [1, D]

    # pack all (1, D) bias / norm vectors into one [9, D] operand
    vecs = jnp.concatenate([p['b_in'], p['gn_w'], p['gn_b'], bl2_t, p['bbi'],
                            p['lnw'], p['lnb'], p['b1'], p['b2']], axis=0)

    weights = [p['w_in'].astype(mm_dtype), wb_bd, bb_t, wsel_exp, wl2_bd,
               p['wba'].astype(mm_dtype), p['wbq'].astype(mm_dtype),
               p['w1'].astype(mm_dtype), p['w2'].astype(mm_dtype), vecs]
    if use_gn_matmul:
        gmat = jnp.kron(eyeH, jnp.full((Dh, Dh), 1.0 / Dh, f32)).astype(mm_dtype)
        weights.append(gmat)

    mask_col = mask[:, 0, :, None].astype(f32)                   # [B, M, 1]
    out_dtype = query.dtype

    def batch_map(b):
        return (b, 0, 0)

    def const_map(ndim):
        return lambda b: (0,) * ndim

    in_specs = [
        pl.BlockSpec((1, M, D), batch_map),                      # query
        pl.BlockSpec((1, M, D), batch_map),                      # key    (no HBM concat)
        pl.BlockSpec((1, M, D), batch_map),                      # value2 (no HBM concat)
        pl.BlockSpec((1, M, 1), batch_map),                      # mask column
    ] + [pl.BlockSpec(w.shape, const_map(w.ndim)) for w in weights]

    # --- explicit VMEM budget (v7x: 64 MiB phys / 32 MiB scoped default; v5e: 16 MiB)
    def nbytes(a):
        return math.prod(a.shape) * jnp.dtype(a.dtype).itemsize

    act_bytes = 2 * (3 * M * D * jnp.dtype(query.dtype).itemsize      # q/k/v2 blocks (x2 bufs)
                     + M * 4                                          # mask column
                     + M * D * jnp.dtype(out_dtype).itemsize)         # output block
    w_bytes = 2 * sum(nbytes(w) for w in weights)                     # constant blocks (x2 bufs)
    scratch_bytes = 8 * M * D * 4                                     # f32 intermediates headroom
    try:
        phys_vmem = getattr(pltpu.get_tpu_info(), "vmem_capacity_bytes", 64 << 20)
    except Exception:  # pragma: no cover - conservative fallback
        phys_vmem = 64 << 20
    vmem_limit = int(min(max(act_bytes + w_bytes + scratch_bytes + (2 << 20),
                             32 << 20), (phys_vmem * 7) // 8))

    kernel = functools.partial(_lowrank_kernel, num_heads=H, mm_dtype=mm_dtype,
                               use_gn_matmul=use_gn_matmul)

    return pl.pallas_call(
        kernel,
        out_shape=jax.ShapeDtypeStruct((B, M, D), out_dtype),
        grid=(B,),
        in_specs=in_specs,
        out_specs=pl.BlockSpec((1, M, D), batch_map),
        compiler_params=pltpu.CompilerParams(
            dimension_semantics=("parallel",),
            vmem_limit_bytes=vmem_limit),
    )(query, key, value2, mask_col, *weights)


# ----------------------------------------------------------------------------
if __name__ == "__main__":
    B, M = 2, 8
    embed_dim, att_heads = 32, 4                 # head_dim=8, mid_dim=8, half_mid=4

    key0 = jax.random.PRNGKey(0)
    kq, kk, kv_, kp = jax.random.split(key0, 4)
    # bf16 activations (halves activation HBM traffic; kernel upcasts where needed)
    query = jax.random.normal(kq, (B, M, embed_dim), jnp.float32).astype(jnp.bfloat16)
    key_t = jax.random.normal(kk, (B, M, embed_dim), jnp.float32).astype(jnp.bfloat16)
    value2 = jax.random.normal(kv_, (B, M, embed_dim), jnp.float32).astype(jnp.bfloat16)
    mask = jnp.ones((B, 1, M), jnp.float32)
    mask = mask.at[:, :, -2:].set(0.0)           # a couple of padded positions

    params = init_params(kp, embed_dim, att_heads)

    out = low_rank_forward(params, query, key_t, value2, mask, att_heads)
    out = jax.block_until_ready(out)
    assert out.shape == (B, M, embed_dim), out.shape
    assert bool(jnp.all(jnp.isfinite(out.astype(jnp.float32))))
    print("KERNEL_OK")
</pallas_src>

<mosaic_0001>
module attributes {stable_mosaic.version = 11 : i64} {
  func.func @_lowrank_kernel(%arg0: i32, %arg1: memref<1x8x32xbf16, #tpu.memory_space<vmem>>, %arg2: memref<1x8x32xbf16, #tpu.memory_space<vmem>>, %arg3: memref<1x8x32xbf16, #tpu.memory_space<vmem>>, %arg4: memref<1x8x1xf32, #tpu.memory_space<vmem>>, %arg5: memref<32x32xbf16, #tpu.memory_space<vmem>>, %arg6: memref<32x16xbf16, #tpu.memory_space<vmem>>, %arg7: memref<1x16xf32, #tpu.memory_space<vmem>>, %arg8: memref<16x32xbf16, #tpu.memory_space<vmem>>, %arg9: memref<16x32xbf16, #tpu.memory_space<vmem>>, %arg10: memref<32x32xbf16, #tpu.memory_space<vmem>>, %arg11: memref<32x32xbf16, #tpu.memory_space<vmem>>, %arg12: memref<32x32xbf16, #tpu.memory_space<vmem>>, %arg13: memref<32x32xbf16, #tpu.memory_space<vmem>>, %arg14: memref<9x32xf32, #tpu.memory_space<vmem>>, %arg15: memref<32x32xbf16, #tpu.memory_space<vmem>>, %arg16: memref<1x8x32xbf16, #tpu.memory_space<vmem>>) attributes {dimension_semantics = [#tpu.dimension_semantics<parallel>], iteration_bounds = array<i64: 2>, scalar_prefetch = 0 : i64, scratch_operands = 0 : i64, tpu.core_type = #tpu.core_type<tc>, window_params = [{transform_indices = @transform_0, window_bounds = array<i64: 1, 8, 32>}, {transform_indices = @transform_1, window_bounds = array<i64: 1, 8, 32>}, {transform_indices = @transform_2, window_bounds = array<i64: 1, 8, 32>}, {transform_indices = @transform_3, window_bounds = array<i64: 1, 8, 1>}, {pipeline_mode = #tpu.pipeline_mode<synchronous>, transform_indices = @transform_4, window_bounds = array<i64: 32, 32>}, {pipeline_mode = #tpu.pipeline_mode<synchronous>, transform_indices = @transform_5, window_bounds = array<i64: 32, 16>}, {pipeline_mode = #tpu.pipeline_mode<synchronous>, transform_indices = @transform_6, window_bounds = array<i64: 1, 16>}, {pipeline_mode = #tpu.pipeline_mode<synchronous>, transform_indices = @transform_7, window_bounds = array<i64: 16, 32>}, {pipeline_mode = #tpu.pipeline_mode<synchronous>, transform_indices = @transform_8, window_bounds = array<i64: 16, 32>}, {pipeline_mode = #tpu.pipeline_mode<synchronous>, transform_indices = @transform_9, window_bounds = array<i64: 32, 32>}, {pipeline_mode = #tpu.pipeline_mode<synchronous>, transform_indices = @transform_10, window_bounds = array<i64: 32, 32>}, {pipeline_mode = #tpu.pipeline_mode<synchronous>, transform_indices = @transform_11, window_bounds = array<i64: 32, 32>}, {pipeline_mode = #tpu.pipeline_mode<synchronous>, transform_indices = @transform_12, window_bounds = array<i64: 32, 32>}, {pipeline_mode = #tpu.pipeline_mode<synchronous>, transform_indices = @transform_13, window_bounds = array<i64: 9, 32>}, {pipeline_mode = #tpu.pipeline_mode<synchronous>, transform_indices = @transform_14, window_bounds = array<i64: 32, 32>}, {transform_indices = @transform_15, window_bounds = array<i64: 1, 8, 32>}]} {
    %c0 = arith.constant 0 : index
    %c0_0 = arith.constant 0 : index
    %0 = vector.load %arg14[%c0, %c0_0] : memref<9x32xf32, #tpu.memory_space<vmem>>, vector<1x32xf32>
    %c1 = arith.constant 1 : index
    %c0_1 = arith.constant 0 : index
    %1 = vector.load %arg14[%c1, %c0_1] : memref<9x32xf32, #tpu.memory_space<vmem>>, vector<1x32xf32>
    %c2 = arith.constant 2 : index
    %c0_2 = arith.constant 0 : index
    %2 = vector.load %arg14[%c2, %c0_2] : memref<9x32xf32, #tpu.memory_space<vmem>>, vector<1x32xf32>
    %c3 = arith.constant 3 : index
    %c0_3 = arith.constant 0 : index
    %3 = vector.load %arg14[%c3, %c0_3] : memref<9x32xf32, #tpu.memory_space<vmem>>, vector<1x32xf32>
    %c4 = arith.constant 4 : index
    %c0_4 = arith.constant 0 : index
    %4 = vector.load %arg14[%c4, %c0_4] : memref<9x32xf32, #tpu.memory_space<vmem>>, vector<1x32xf32>
    %c5 = arith.constant 5 : index
    %c0_5 = arith.constant 0 : index
    %5 = vector.load %arg14[%c5, %c0_5] : memref<9x32xf32, #tpu.memory_space<vmem>>, vector<1x32xf32>
    %c6 = arith.constant 6 : index
    %c0_6 = arith.constant 0 : index
    %6 = vector.load %arg14[%c6, %c0_6] : memref<9x32xf32, #tpu.memory_space<vmem>>, vector<1x32xf32>
    %c7 = arith.constant 7 : index
    %c0_7 = arith.constant 0 : index
    %7 = vector.load %arg14[%c7, %c0_7] : memref<9x32xf32, #tpu.memory_space<vmem>>, vector<1x32xf32>
    %c8 = arith.constant 8 : index
    %c0_8 = arith.constant 0 : index
    %8 = vector.load %arg14[%c8, %c0_8] : memref<9x32xf32, #tpu.memory_space<vmem>>, vector<1x32xf32>
    %c0_9 = arith.constant 0 : index
    %c0_10 = arith.constant 0 : index
    %c0_11 = arith.constant 0 : index
    %9 = vector.load %arg1[%c0_9, %c0_10, %c0_11] : memref<1x8x32xbf16, #tpu.memory_space<vmem>>, vector<1x8x32xbf16>
    %10 = vector.shape_cast %9 : vector<1x8x32xbf16> to vector<8x32xbf16>
    %c0_12 = arith.constant 0 : index
    %c0_13 = arith.constant 0 : index
    %c0_14 = arith.constant 0 : index
    %11 = vector.load %arg4[%c0_12, %c0_13, %c0_14] : memref<1x8x1xf32, #tpu.memory_space<vmem>>, vector<1x8x1xf32>
    %12 = vector.shape_cast %11 : vector<1x8x1xf32> to vector<8x1xf32>
    %13 = arith.extf %10 : vector<8x32xbf16> to vector<8x32xf32>
    %c0_15 = arith.constant 0 : index
    %c0_16 = arith.constant 0 : index
    %14 = vector.load %arg5[%c0_15, %c0_16] : memref<32x32xbf16, #tpu.memory_space<vmem>>, vector<32x32xbf16>
    %cst = arith.constant dense<0.000000e+00> : vector<1xf32>
    %15 = vector.multi_reduction <add>, %12, %cst [0] : vector<8x1xf32> to vector<1xf32>
    %16 = vector.shape_cast %15 : vector<1xf32> to vector<1x1xf32>
    %cst_17 = arith.constant 9.99999997E-7 : f32
    %17 = vector.broadcast %cst_17 : f32 to vector<1x1xf32>
    %18 = arith.maximumf %16, %17 : vector<1x1xf32>
    %19 = tpu.reciprocal %18 {approx = true} : vector<1x1xf32> -> vector<1x1xf32>
    %20 = vector.broadcast %12 : vector<8x1xf32> to vector<8x32xf32>
    %21 = arith.mulf %13, %20 : vector<8x32xf32>
    %cst_18 = arith.constant dense<0.000000e+00> : vector<32xf32>
    %22 = vector.multi_reduction <add>, %21, %cst_18 [0] : vector<8x32xf32> to vector<32xf32>
    %23 = vector.shape_cast %22 : vector<32xf32> to vector<1x32xf32>
    %24 = vector.broadcast %19 : vector<1x1xf32> to vector<1x32xf32>
    %25 = arith.mulf %23, %24 : vector<1x32xf32>
    %c0_19 = arith.constant 0 : index
    %c0_20 = arith.constant 0 : index
    %c0_21 = arith.constant 0 : index
    %26 = vector.load %arg2[%c0_19, %c0_20, %c0_21] : memref<1x8x32xbf16, #tpu.memory_space<vmem>>, vector<1x8x32xbf16>
    %27 = vector.shape_cast %26 : vector<1x8x32xbf16> to vector<8x32xbf16>
    %cst_22 = arith.constant dense<0.000000e+00> : vector<8x32xf32>
    %28 = tpu.matmul %27, %14, %cst_22 {dimension_numbers = #tpu.dot_dimension_numbers<[1], [0], [0], [1], [0, 0, 1, 1], [], []>} : vector<8x32xbf16>, vector<32x32xbf16>, vector<8x32xf32> -> vector<8x32xf32>
    %29 = vector.broadcast %0 : vector<1x32xf32> to vector<8x32xf32>
    %30 = arith.addf %28, %29 : vector<8x32xf32>
    %cst_23 = arith.constant 0.000000e+00 : f32
    %31 = vector.broadcast %cst_23 : f32 to vector<8x32xf32>
    %32 = arith.cmpf ogt, %30, %31 : vector<8x32xf32>
    %cst_24 = arith.constant 0.000000e+00 : f32
    %33 = vector.broadcast %cst_24 : f32 to vector<8x32xf32>
    %34 = arith.minimumf %30, %33 : vector<8x32xf32>
    %cst_25 = arith.constant 0.769230782 : f32
    %35 = vector.broadcast %cst_25 : f32 to vector<8x32xf32>
    %36 = arith.mulf %34, %35 : vector<8x32xf32>
    %37 = math.exp %36 : vector<8x32xf32>
    %cst_26 = arith.constant 1.000000e+00 : f32
    %38 = vector.broadcast %cst_26 : f32 to vector<8x32xf32>
    %39 = arith.subf %37, %38 : vector<8x32xf32>
    %cst_27 = arith.constant 1.300000e+00 : f32
    %40 = vector.broadcast %cst_27 : f32 to vector<8x32xf32>
    %41 = arith.mulf %40, %39 : vector<8x32xf32>
    %42 = arith.select %32, %30, %41 : vector<8x32xi1>, vector<8x32xf32>
    %c0_28 = arith.constant 0 : index
    %c0_29 = arith.constant 0 : index
    %43 = vector.load %arg15[%c0_28, %c0_29] : memref<32x32xbf16, #tpu.memory_space<vmem>>, vector<32x32xbf16>
    %44 = arith.truncf %42 : vector<8x32xf32> to vector<8x32xbf16>
    %cst_30 = arith.constant dense<0.000000e+00> : vector<8x32xf32>
    %45 = tpu.matmul %44, %43, %cst_30 {dimension_numbers = #tpu.dot_dimension_numbers<[1], [0], [0], [1], [0, 0, 1, 1], [], []>} : vector<8x32xbf16>, vector<32x32xbf16>, vector<8x32xf32> -> vector<8x32xf32>
    %46 = arith.subf %42, %45 : vector<8x32xf32>
    %47 = arith.mulf %46, %46 : vector<8x32xf32>
    %48 = arith.truncf %47 : vector<8x32xf32> to vector<8x32xbf16>
    %cst_31 = arith.constant dense<0.000000e+00> : vector<8x32xf32>
    %49 = tpu.matmul %48, %43, %cst_31 {dimension_numbers = #tpu.dot_dimension_numbers<[1], [0], [0], [1], [0, 0, 1, 1], [], []>} : vector<8x32xbf16>, vector<32x32xbf16>, vector<8x32xf32> -> vector<8x32xf32>
    %cst_32 = arith.constant 0.000000e+00 : f32
    %50 = vector.broadcast %cst_32 : f32 to vector<8x32xf32>
    %51 = arith.maximumf %49, %50 : vector<8x32xf32>
    %cst_33 = arith.constant 9.99999974E-6 : f32
    %52 = vector.broadcast %cst_33 : f32 to vector<8x32xf32>
    %53 = arith.addf %51, %52 : vector<8x32xf32>
    %54 = math.rsqrt %53 : vector<8x32xf32>
    %55 = arith.mulf %46, %54 : vector<8x32xf32>
    %56 = vector.broadcast %1 : vector<1x32xf32> to vector<8x32xf32>
    %57 = arith.mulf %55, %56 : vector<8x32xf32>
    %58 = vector.broadcast %2 : vector<1x32xf32> to vector<8x32xf32>
    %59 = arith.addf %57, %58 : vector<8x32xf32>
    %c0_34 = arith.constant 0 : index
    %c0_35 = arith.constant 0 : index
    %c0_36 = arith.constant 0 : index
    %60 = vector.load %arg3[%c0_34, %c0_35, %c0_36] : memref<1x8x32xbf16, #tpu.memory_space<vmem>>, vector<1x8x32xbf16>
    %61 = vector.shape_cast %60 : vector<1x8x32xbf16> to vector<8x32xbf16>
    %cst_37 = arith.constant dense<0.000000e+00> : vector<8x32xf32>
    %62 = tpu.matmul %61, %14, %cst_37 {dimension_numbers = #tpu.dot_dimension_numbers<[1], [0], [0], [1], [0, 0, 1, 1], [], []>} : vector<8x32xbf16>, vector<32x32xbf16>, vector<8x32xf32> -> vector<8x32xf32>
    %63 = vector.broadcast %0 : vector<1x32xf32> to vector<8x32xf32>
    %64 = arith.addf %62, %63 : vector<8x32xf32>
    %cst_38 = arith.constant 0.000000e+00 : f32
    %65 = vector.broadcast %cst_38 : f32 to vector<8x32xf32>
    %66 = arith.cmpf ogt, %64, %65 : vector<8x32xf32>
    %cst_39 = arith.constant 0.000000e+00 : f32
    %67 = vector.broadcast %cst_39 : f32 to vector<8x32xf32>
    %68 = arith.minimumf %64, %67 : vector<8x32xf32>
    %cst_40 = arith.constant 0.769230782 : f32
    %69 = vector.broadcast %cst_40 : f32 to vector<8x32xf32>
    %70 = arith.mulf %68, %69 : vector<8x32xf32>
    %71 = math.exp %70 : vector<8x32xf32>
    %cst_41 = arith.constant 1.000000e+00 : f32
    %72 = vector.broadcast %cst_41 : f32 to vector<8x32xf32>
    %73 = arith.subf %71, %72 : vector<8x32xf32>
    %cst_42 = arith.constant 1.300000e+00 : f32
    %74 = vector.broadcast %cst_42 : f32 to vector<8x32xf32>
    %75 = arith.mulf %74, %73 : vector<8x32xf32>
    %76 = arith.select %66, %64, %75 : vector<8x32xi1>, vector<8x32xf32>
    %c0_43 = arith.constant 0 : index
    %c0_44 = arith.constant 0 : index
    %77 = vector.load %arg15[%c0_43, %c0_44] : memref<32x32xbf16, #tpu.memory_space<vmem>>, vector<32x32xbf16>
    %78 = arith.truncf %76 : vector<8x32xf32> to vector<8x32xbf16>
    %cst_45 = arith.constant dense<0.000000e+00> : vector<8x32xf32>
    %79 = tpu.matmul %78, %77, %cst_45 {dimension_numbers = #tpu.dot_dimension_numbers<[1], [0], [0], [1], [0, 0, 1, 1], [], []>} : vector<8x32xbf16>, vector<32x32xbf16>, vector<8x32xf32> -> vector<8x32xf32>
    %80 = arith.subf %76, %79 : vector<8x32xf32>
    %81 = arith.mulf %80, %80 : vector<8x32xf32>
    %82 = arith.truncf %81 : vector<8x32xf32> to vector<8x32xbf16>
    %cst_46 = arith.constant dense<0.000000e+00> : vector<8x32xf32>
    %83 = tpu.matmul %82, %77, %cst_46 {dimension_numbers = #tpu.dot_dimension_numbers<[1], [0], [0], [1], [0, 0, 1, 1], [], []>} : vector<8x32xbf16>, vector<32x32xbf16>, vector<8x32xf32> -> vector<8x32xf32>
    %cst_47 = arith.constant 0.000000e+00 : f32
    %84 = vector.broadcast %cst_47 : f32 to vector<8x32xf32>
    %85 = arith.maximumf %83, %84 : vector<8x32xf32>
    %cst_48 = arith.constant 9.99999974E-6 : f32
    %86 = vector.broadcast %cst_48 : f32 to vector<8x32xf32>
    %87 = arith.addf %85, %86 : vector<8x32xf32>
    %88 = math.rsqrt %87 : vector<8x32xf32>
    %89 = arith.mulf %80, %88 : vector<8x32xf32>
    %90 = vector.broadcast %1 : vector<1x32xf32> to vector<8x32xf32>
    %91 = arith.mulf %89, %90 : vector<8x32xf32>
    %92 = vector.broadcast %2 : vector<1x32xf32> to vector<8x32xf32>
    %93 = arith.addf %91, %92 : vector<8x32xf32>
    %94 = arith.truncf %25 : vector<1x32xf32> to vector<1x32xbf16>
    %cst_49 = arith.constant dense<0.000000e+00> : vector<1x32xf32>
    %95 = tpu.matmul %94, %14, %cst_49 {dimension_numbers = #tpu.dot_dimension_numbers<[1], [0], [0], [1], [0, 0, 1, 1], [], []>} : vector<1x32xbf16>, vector<32x32xbf16>, vector<1x32xf32> -> vector<1x32xf32>
    %96 = arith.addf %95, %0 : vector<1x32xf32>
    %cst_50 = arith.constant 0.000000e+00 : f32
    %97 = vector.broadcast %cst_50 : f32 to vector<1x32xf32>
    %98 = arith.cmpf ogt, %96, %97 : vector<1x32xf32>
    %cst_51 = arith.constant 0.000000e+00 : f32
    %99 = vector.broadcast %cst_51 : f32 to vector<1x32xf32>
    %100 = arith.minimumf %96, %99 : vector<1x32xf32>
    %cst_52 = arith.constant 0.769230782 : f32
    %101 = vector.broadcast %cst_52 : f32 to vector<1x32xf32>
    %102 = arith.mulf %100, %101 : vector<1x32xf32>
    %103 = math.exp %102 : vector<1x32xf32>
    %cst_53 = arith.constant 1.000000e+00 : f32
    %104 = vector.broadcast %cst_53 : f32 to vector<1x32xf32>
    %105 = arith.subf %103, %104 : vector<1x32xf32>
    %cst_54 = arith.constant 1.300000e+00 : f32
    %106 = vector.broadcast %cst_54 : f32 to vector<1x32xf32>
    %107 = arith.mulf %106, %105 : vector<1x32xf32>
    %108 = arith.select %98, %96, %107 : vector<1x32xi1>, vector<1x32xf32>
    %c0_55 = arith.constant 0 : index
    %c0_56 = arith.constant 0 : index
    %109 = vector.load %arg15[%c0_55, %c0_56] : memref<32x32xbf16, #tpu.memory_space<vmem>>, vector<32x32xbf16>
    %110 = arith.truncf %108 : vector<1x32xf32> to vector<1x32xbf16>
    %cst_57 = arith.constant dense<0.000000e+00> : vector<1x32xf32>
    %111 = tpu.matmul %110, %109, %cst_57 {dimension_numbers = #tpu.dot_dimension_numbers<[1], [0], [0], [1], [0, 0, 1, 1], [], []>} : vector<1x32xbf16>, vector<32x32xbf16>, vector<1x32xf32> -> vector<1x32xf32>
    %112 = arith.subf %108, %111 : vector<1x32xf32>
    %113 = arith.mulf %112, %112 : vector<1x32xf32>
    %114 = arith.truncf %113 : vector<1x32xf32> to vector<1x32xbf16>
    %cst_58 = arith.constant dense<0.000000e+00> : vector<1x32xf32>
    %115 = tpu.matmul %114, %109, %cst_58 {dimension_numbers = #tpu.dot_dimension_numbers<[1], [0], [0], [1], [0, 0, 1, 1], [], []>} : vector<1x32xbf16>, vector<32x32xbf16>, vector<1x32xf32> -> vector<1x32xf32>
    %cst_59 = arith.constant 0.000000e+00 : f32
    %116 = vector.broadcast %cst_59 : f32 to vector<1x32xf32>
    %117 = arith.maximumf %115, %116 : vector<1x32xf32>
    %cst_60 = arith.constant 9.99999974E-6 : f32
    %118 = vector.broadcast %cst_60 : f32 to vector<1x32xf32>
    %119 = arith.addf %117, %118 : vector<1x32xf32>
    %120 = math.rsqrt %119 : vector<1x32xf32>
    %121 = arith.mulf %112, %120 : vector<1x32xf32>
    %122 = arith.mulf %121, %1 : vector<1x32xf32>
    %123 = arith.addf %122, %2 : vector<1x32xf32>
    %124 = vector.broadcast %123 : vector<1x32xf32> to vector<8x32xf32>
    %125 = arith.mulf %124, %59 : vector<8x32xf32>
    %126 = arith.truncf %125 : vector<8x32xf32> to vector<8x32xbf16>
    %c0_61 = arith.constant 0 : index
    %c0_62 = arith.constant 0 : index
    %127 = vector.load %arg6[%c0_61, %c0_62] : memref<32x16xbf16, #tpu.memory_space<vmem>>, vector<32x16xbf16>
    %cst_63 = arith.constant dense<0.000000e+00> : vector<8x16xf32>
    %128 = tpu.matmul %126, %127, %cst_63 {dimension_numbers = #tpu.dot_dimension_numbers<[1], [0], [0], [1], [0, 0, 1, 1], [], []>} : vector<8x32xbf16>, vector<32x16xbf16>, vector<8x16xf32> -> vector<8x16xf32>
    %c0_64 = arith.constant 0 : index
    %c0_65 = arith.constant 0 : index
    %129 = vector.load %arg7[%c0_64, %c0_65] : memref<1x16xf32, #tpu.memory_space<vmem>>, vector<1x16xf32>
    %130 = vector.broadcast %129 : vector<1x16xf32> to vector<8x16xf32>
    %131 = arith.addf %128, %130 : vector<8x16xf32>
    %cst_66 = arith.constant 0.000000e+00 : f32
    %132 = vector.broadcast %cst_66 : f32 to vector<8x16xf32>
    %133 = arith.maximumf %131, %132 : vector<8x16xf32>
    %134 = vector.broadcast %12 : vector<8x1xf32> to vector<8x16xf32>
    %135 = arith.mulf %133, %134 : vector<8x16xf32>
    %cst_67 = arith.constant dense<0.000000e+00> : vector<16xf32>
    %136 = vector.multi_reduction <add>, %135, %cst_67 [0] : vector<8x16xf32> to vector<16xf32>
    %137 = vector.shape_cast %136 : vector<16xf32> to vector<1x16xf32>
    %138 = vector.broadcast %19 : vector<1x1xf32> to vector<1x16xf32>
    %139 = arith.mulf %137, %138 : vector<1x16xf32>
    %140 = arith.truncf %133 : vector<8x16xf32> to vector<8x16xbf16>
    %c0_68 = arith.constant 0 : index
    %c0_69 = arith.constant 0 : index
    %141 = vector.load %arg8[%c0_68, %c0_69] : memref<16x32xbf16, #tpu.memory_space<vmem>>, vector<16x32xbf16>
    %cst_70 = arith.constant dense<0.000000e+00> : vector<8x32xf32>
    %142 = tpu.matmul %140, %141, %cst_70 {dimension_numbers = #tpu.dot_dimension_numbers<[1], [0], [0], [1], [0, 0, 1, 1], [], []>} : vector<8x16xbf16>, vector<16x32xbf16>, vector<8x32xf32> -> vector<8x32xf32>
    %cst_71 = arith.constant dense<0xFF800000> : vector<32xf32>
    %143 = vector.multi_reduction <maximumf>, %142, %cst_71 [0] : vector<8x32xf32> to vector<32xf32>
    %144 = vector.shape_cast %143 : vector<32xf32> to vector<1x32xf32>
    %145 = vector.broadcast %144 : vector<1x32xf32> to vector<8x32xf32>
    %146 = arith.subf %142, %145 : vector<8x32xf32>
    %147 = math.exp %146 : vector<8x32xf32>
    %148 = vector.broadcast %12 : vector<8x1xf32> to vector<8x32xf32>
    %149 = arith.mulf %147, %148 : vector<8x32xf32>
    %cst_72 = arith.constant dense<0.000000e+00> : vector<32xf32>
    %150 = vector.multi_reduction <add>, %149, %cst_72 [0] : vector<8x32xf32> to vector<32xf32>
    %151 = vector.shape_cast %150 : vector<32xf32> to vector<1x32xf32>
    %cst_73 = arith.constant 1.000000e-30 : f32
    %152 = vector.broadcast %cst_73 : f32 to vector<1x32xf32>
    %153 = arith.maximumf %151, %152 : vector<1x32xf32>
    %154 = tpu.reciprocal %153 {approx = true} : vector<1x32xf32> -> vector<1x32xf32>
    %155 = vector.broadcast %154 : vector<1x32xf32> to vector<8x32xf32>
    %156 = arith.mulf %149, %155 : vector<8x32xf32>
    %157 = arith.mulf %156, %93 : vector<8x32xf32>
    %cst_74 = arith.constant dense<0.000000e+00> : vector<32xf32>
    %158 = vector.multi_reduction <add>, %157, %cst_74 [0] : vector<8x32xf32> to vector<32xf32>
    %159 = vector.shape_cast %158 : vector<32xf32> to vector<1x32xf32>
    %160 = arith.truncf %139 : vector<1x16xf32> to vector<1x16xbf16>
    %c0_75 = arith.constant 0 : index
    %c0_76 = arith.constant 0 : index
    %161 = vector.load %arg9[%c0_75, %c0_76] : memref<16x32xbf16, #tpu.memory_space<vmem>>, vector<16x32xbf16>
    %cst_77 = arith.constant dense<0.000000e+00> : vector<1x32xf32>
    %162 = tpu.matmul %160, %161, %cst_77 {dimension_numbers = #tpu.dot_dimension_numbers<[1], [0], [0], [1], [0, 0, 1, 1], [], []>} : vector<1x16xbf16>, vector<16x32xbf16>, vector<1x32xf32> -> vector<1x32xf32>
    %163 = arith.addf %162, %3 : vector<1x32xf32>
    %164 = arith.negf %163 : vector<1x32xf32>
    %165 = math.exp %164 : vector<1x32xf32>
    %cst_78 = arith.constant 1.000000e+00 : f32
    %166 = vector.broadcast %cst_78 : f32 to vector<1x32xf32>
    %167 = arith.addf %166, %165 : vector<1x32xf32>
    %168 = arith.divf %166, %167 : vector<1x32xf32>
    %169 = arith.mulf %123, %159 : vector<1x32xf32>
    %170 = arith.mulf %169, %168 : vector<1x32xf32>
    %171 = arith.truncf %170 : vector<1x32xf32> to vector<1x32xbf16>
    %c0_79 = arith.constant 0 : index
    %c0_80 = arith.constant 0 : index
    %172 = vector.load %arg10[%c0_79, %c0_80] : memref<32x32xbf16, #tpu.memory_space<vmem>>, vector<32x32xbf16>
    %cst_81 = arith.constant dense<0.000000e+00> : vector<1x32xf32>
    %173 = tpu.matmul %171, %172, %cst_81 {dimension_numbers = #tpu.dot_dimension_numbers<[1], [0], [0], [1], [0, 0, 1, 1], [], []>} : vector<1x32xbf16>, vector<32x32xbf16>, vector<1x32xf32> -> vector<1x32xf32>
    %c0_82 = arith.constant 0 : index
    %c0_83 = arith.constant 0 : index
    %174 = vector.load %arg11[%c0_82, %c0_83] : memref<32x32xbf16, #tpu.memory_space<vmem>>, vector<32x32xbf16>
    %cst_84 = arith.constant dense<0.000000e+00> : vector<8x32xf32>
    %175 = tpu.matmul %10, %174, %cst_84 {dimension_numbers = #tpu.dot_dimension_numbers<[1], [0], [0], [1], [0, 0, 1, 1], [], []>} : vector<8x32xbf16>, vector<32x32xbf16>, vector<8x32xf32> -> vector<8x32xf32>
    %176 = vector.broadcast %173 : vector<1x32xf32> to vector<8x32xf32>
    %177 = arith.addf %175, %176 : vector<8x32xf32>
    %178 = vector.broadcast %4 : vector<1x32xf32> to vector<8x32xf32>
    %179 = arith.addf %177, %178 : vector<8x32xf32>
    %cst_85 = arith.constant 0.000000e+00 : f32
    %180 = vector.broadcast %cst_85 : f32 to vector<8x32xf32>
    %181 = arith.maximumf %179, %180 : vector<8x32xf32>
    %182 = arith.addf %181, %13 : vector<8x32xf32>
    %cst_86 = arith.constant dense<0.000000e+00> : vector<8xf32>
    %183 = vector.multi_reduction <add>, %182, %cst_86 [1] : vector<8x32xf32> to vector<8xf32>
    %184 = vector.shape_cast %183 : vector<8xf32> to vector<8x1xf32>
    %cst_87 = arith.constant 3.200000e+01 : f32
    %185 = vector.broadcast %cst_87 : f32 to vector<8x1xf32>
    %186 = arith.divf %184, %185 : vector<8x1xf32>
    %187 = arith.mulf %182, %182 : vector<8x32xf32>
    %cst_88 = arith.constant dense<0.000000e+00> : vector<8xf32>
    %188 = vector.multi_reduction <add>, %187, %cst_88 [1] : vector<8x32xf32> to vector<8xf32>
    %189 = vector.shape_cast %188 : vector<8xf32> to vector<8x1xf32>
    %cst_89 = arith.constant 3.200000e+01 : f32
    %190 = vector.broadcast %cst_89 : f32 to vector<8x1xf32>
    %191 = arith.divf %189, %190 : vector<8x1xf32>
    %192 = arith.mulf %186, %186 : vector<8x1xf32>
    %193 = arith.subf %191, %192 : vector<8x1xf32>
    %194 = vector.broadcast %186 : vector<8x1xf32> to vector<8x32xf32>
    %195 = arith.subf %182, %194 : vector<8x32xf32>
    %cst_90 = arith.constant 0.000000e+00 : f32
    %196 = vector.broadcast %cst_90 : f32 to vector<8x1xf32>
    %197 = arith.maximumf %193, %196 : vector<8x1xf32>
    %cst_91 = arith.constant 9.99999974E-6 : f32
    %198 = vector.broadcast %cst_91 : f32 to vector<8x1xf32>
    %199 = arith.addf %197, %198 : vector<8x1xf32>
    %200 = math.rsqrt %199 : vector<8x1xf32>
    %201 = vector.broadcast %200 : vector<8x1xf32> to vector<8x32xf32>
    %202 = arith.mulf %195, %201 : vector<8x32xf32>
    %203 = vector.broadcast %5 : vector<1x32xf32> to vector<8x32xf32>
    %204 = arith.mulf %202, %203 : vector<8x32xf32>
    %205 = vector.broadcast %6 : vector<1x32xf32> to vector<8x32xf32>
    %206 = arith.addf %204, %205 : vector<8x32xf32>
    %207 = arith.truncf %206 : vector<8x32xf32> to vector<8x32xbf16>
    %c0_92 = arith.constant 0 : index
    %c0_93 = arith.constant 0 : index
    %208 = vector.load %arg12[%c0_92, %c0_93] : memref<32x32xbf16, #tpu.memory_space<vmem>>, vector<32x32xbf16>
    %cst_94 = arith.constant dense<0.000000e+00> : vector<8x32xf32>
    %209 = tpu.matmul %207, %208, %cst_94 {dimension_numbers = #tpu.dot_dimension_numbers<[1], [0], [0], [1], [0, 0, 1, 1], [], []>} : vector<8x32xbf16>, vector<32x32xbf16>, vector<8x32xf32> -> vector<8x32xf32>
    %210 = vector.broadcast %7 : vector<1x32xf32> to vector<8x32xf32>
    %211 = arith.addf %209, %210 : vector<8x32xf32>
    %cst_95 = arith.constant 0.000000e+00 : f32
    %212 = vector.broadcast %cst_95 : f32 to vector<8x32xf32>
    %213 = arith.maximumf %211, %212 : vector<8x32xf32>
    %214 = arith.truncf %213 : vector<8x32xf32> to vector<8x32xbf16>
    %c0_96 = arith.constant 0 : index
    %c0_97 = arith.constant 0 : index
    %215 = vector.load %arg13[%c0_96, %c0_97] : memref<32x32xbf16, #tpu.memory_space<vmem>>, vector<32x32xbf16>
    %cst_98 = arith.constant dense<0.000000e+00> : vector<8x32xf32>
    %216 = tpu.matmul %214, %215, %cst_98 {dimension_numbers = #tpu.dot_dimension_numbers<[1], [0], [0], [1], [0, 0, 1, 1], [], []>} : vector<8x32xbf16>, vector<32x32xbf16>, vector<8x32xf32> -> vector<8x32xf32>
    %217 = vector.broadcast %8 : vector<1x32xf32> to vector<8x32xf32>
    %218 = arith.addf %216, %217 : vector<8x32xf32>
    %219 = vector.shape_cast %218 : vector<8x32xf32> to vector<1x8x32xf32>
    %220 = arith.truncf %219 : vector<1x8x32xf32> to vector<1x8x32xbf16>
    %c0_99 = arith.constant 0 : index
    %c0_100 = arith.constant 0 : index
    %c0_101 = arith.constant 0 : index
    %221 = vector.load %arg16[%c0_99, %c0_100, %c0_101] : memref<1x8x32xbf16, #tpu.memory_space<vmem>>, vector<1x8x32xbf16>
    tpu.vector_store %arg16[%c0_99, %c0_100, %c0_101], %220 {strides = array<i32>} : memref<1x8x32xbf16, #tpu.memory_space<vmem>>, vector<1x8x32xbf16>,
    return
  }
  func.func @transform_0(%arg0: i32) -> (i32, i32, i32) {
    %c0_i32 = arith.constant 0 : i32
    %c0_i32_0 = arith.constant 0 : i32
    %c0_i32_1 = arith.constant 0 : i32
    return %arg0, %c0_i32, %c0_i32_0 : i32, i32, i32
  }
  func.func @transform_1(%arg0: i32) -> (i32, i32, i32) {
    %c0_i32 = arith.constant 0 : i32
    %c0_i32_0 = arith.constant 0 : i32
    %c0_i32_1 = arith.constant 0 : i32
    return %arg0, %c0_i32, %c0_i32_0 : i32, i32, i32
  }
  func.func @transform_2(%arg0: i32) -> (i32, i32, i32) {
    %c0_i32 = arith.constant 0 : i32
    %c0_i32_0 = arith.constant 0 : i32
    %c0_i32_1 = arith.constant 0 : i32
    return %arg0, %c0_i32, %c0_i32_0 : i32, i32, i32
  }
  func.func @transform_3(%arg0: i32) -> (i32, i32, i32) {
    %c0_i32 = arith.constant 0 : i32
    %c0_i32_0 = arith.constant 0 : i32
    %c0_i32_1 = arith.constant 0 : i32
    return %arg0, %c0_i32, %c0_i32_0 : i32, i32, i32
  }
  func.func @transform_4(%arg0: i32) -> (i32, i32) {
    %c0_i32 = arith.constant 0 : i32
    %c0_i32_0 = arith.constant 0 : i32
    %c0_i32_1 = arith.constant 0 : i32
    return %c0_i32, %c0_i32_0 : i32, i32
  }
  func.func @transform_5(%arg0: i32) -> (i32, i32) {
    %c0_i32 = arith.constant 0 : i32
    %c0_i32_0 = arith.constant 0 : i32
    %c0_i32_1 = arith.constant 0 : i32
    return %c0_i32, %c0_i32_0 : i32, i32
  }
  func.func @transform_6(%arg0: i32) -> (i32, i32) {
    %c0_i32 = arith.constant 0 : i32
    %c0_i32_0 = arith.constant 0 : i32
    %c0_i32_1 = arith.constant 0 : i32
    return %c0_i32, %c0_i32_0 : i32, i32
  }
  func.func @transform_7(%arg0: i32) -> (i32, i32) {
    %c0_i32 = arith.constant 0 : i32
    %c0_i32_0 = arith.constant 0 : i32
    %c0_i32_1 = arith.constant 0 : i32
    return %c0_i32, %c0_i32_0 : i32, i32
  }
  func.func @transform_8(%arg0: i32) -> (i32, i32) {
    %c0_i32 = arith.constant 0 : i32
    %c0_i32_0 = arith.constant 0 : i32
    %c0_i32_1 = arith.constant 0 : i32
    return %c0_i32, %c0_i32_0 : i32, i32
  }
  func.func @transform_9(%arg0: i32) -> (i32, i32) {
    %c0_i32 = arith.constant 0 : i32
    %c0_i32_0 = arith.constant 0 : i32
    %c0_i32_1 = arith.constant 0 : i32
    return %c0_i32, %c0_i32_0 : i32, i32
  }
  func.func @transform_10(%arg0: i32) -> (i32, i32) {
    %c0_i32 = arith.constant 0 : i32
    %c0_i32_0 = arith.constant 0 : i32
    %c0_i32_1 = arith.constant 0 : i32
    return %c0_i32, %c0_i32_0 : i32, i32
  }
  func.func @transform_11(%arg0: i32) -> (i32, i32) {
    %c0_i32 = arith.constant 0 : i32
    %c0_i32_0 = arith.constant 0 : i32
    %c0_i32_1 = arith.constant 0 : i32
    return %c0_i32, %c0_i32_0 : i32, i32
  }
  func.func @transform_12(%arg0: i32) -> (i32, i32) {
    %c0_i32 = arith.constant 0 : i32
    %c0_i32_0 = arith.constant 0 : i32
    %c0_i32_1 = arith.constant 0 : i32
    return %c0_i32, %c0_i32_0 : i32, i32
  }
  func.func @transform_13(%arg0: i32) -> (i32, i32) {
    %c0_i32 = arith.constant 0 : i32
    %c0_i32_0 = arith.constant 0 : i32
    %c0_i32_1 = arith.constant 0 : i32
    return %c0_i32, %c0_i32_0 : i32, i32
  }
  func.func @transform_14(%arg0: i32) -> (i32, i32) {
    %c0_i32 = arith.constant 0 : i32
    %c0_i32_0 = arith.constant 0 : i32
    %c0_i32_1 = arith.constant 0 : i32
    return %c0_i32, %c0_i32_0 : i32, i32
  }
  func.func @transform_15(%arg0: i32) -> (i32, i32, i32) {
    %c0_i32 = arith.constant 0 : i32
    %c0_i32_0 = arith.constant 0 : i32
    %c0_i32_1 = arith.constant 0 : i32
    return %arg0, %c0_i32, %c0_i32_0 : i32, i32, i32
  }
}

</mosaic_0001>

<llo_original>
// kernel: tpu_custom_call.1
$region0: #{tpu_custom_call.1}
  #allocation0 [shape = 'u32[]', space=smem, size = 0x4, offset = 0x4, fixed_abs, tag = 'smem constant byte address 0x4 - core index']
  #allocation1 [shape = 'u32[144,128]{1,0:T(1,128)}', space=vmem, size = 0x12000, scoped, tag = 'internal scratch']
  %s0 = inlined_call_operand.hbm [shape: bf16[2,8,32], index: 0, kind: input, shape index: {}]
  %s1 = inlined_call_operand.hbm [shape: bf16[2,8,32], index: 1, kind: input, shape index: {}]
  %s2 = inlined_call_operand.hbm [shape: bf16[2,8,32], index: 2, kind: input, shape index: {}]
  %s3 = inlined_call_operand.vmem [shape: f32[2,8,1], index: 3, kind: input, shape index: {}]
  %s4 = inlined_call_operand.vmem [shape: bf16[32,32], index: 4, kind: input, shape index: {}]
  %s5 = inlined_call_operand.vmem [shape: bf16[32,16], index: 5, kind: input, shape index: {}]
  %s6 = inlined_call_operand.hbm [shape: f32[1,16], index: 6, kind: input, shape index: {}]
  %s7 = inlined_call_operand.hbm [shape: bf16[16,32], index: 7, kind: input, shape index: {}]
  %s8 = inlined_call_operand.hbm [shape: bf16[16,32], index: 8, kind: input, shape index: {}]
  %s9 = inlined_call_operand.vmem [shape: bf16[32,32], index: 9, kind: input, shape index: {}]
  %s10 = inlined_call_operand.vmem [shape: bf16[32,32], index: 10, kind: input, shape index: {}]
  %s11 = inlined_call_operand.vmem [shape: bf16[32,32], index: 11, kind: input, shape index: {}]
  %s12 = inlined_call_operand.vmem [shape: bf16[32,32], index: 12, kind: input, shape index: {}]
  %s13 = inlined_call_operand.hbm [shape: f32[9,32], index: 13, kind: input, shape index: {}]
  %s14 = inlined_call_operand.hbm [shape: bf16[32,32], index: 14, kind: input, shape index: {}]
  %s15 = inlined_call_operand.hbm [shape: bf16[2,8,32], index: 15, kind: output, shape index: {}]
  %s16 = sld [smem:[#allocation0]]
  $region125: #{tpu_custom_call.1} parent=0
    _
  %s18 = ssub.s32 1, %s16
  %s19 = scalar_select 0, %s18, %s16
  $region1: #{tpu_custom_call.1} parent=0
    #allocation2 [shape = 'u8[4096]{0}', space=vmem, size = 0x1000, scoped, tag = 'input window, operand 0']
    #allocation3 [shape = 's32[2]{0}', space=sflag, size = 0x8, scoped, tag = 'scoped memory for tpu_custom_call.1']
    #allocation4 [shape = 's32[2]{0}', space=sflag, size = 0x8, scoped, tag = 'scoped memory for tpu_custom_call.1']
    #allocation5 [shape = 'u8[4096]{0}', space=vmem, size = 0x1000, scoped, tag = 'input window, operand 1']
    #allocation6 [shape = 's32[2]{0}', space=sflag, size = 0x8, scoped, tag = 'scoped memory for tpu_custom_call.1']
    #allocation7 [shape = 'u8[4096]{0}', space=vmem, size = 0x1000, scoped, tag = 'input window, operand 2']
    #allocation8 [shape = 'u8[512]{0}', space=vmem, size = 0x400, scoped, tag = 'input window, operand 6, single buffered']
    #allocation9 [shape = 's32[1]{0}', space=sflag, size = 0x4, scoped, tag = 'scoped memory for tpu_custom_call.1']
    #allocation10 [shape = 'u8[4096]{0}', space=vmem, size = 0x1000, scoped, tag = 'input window, operand 7, single buffered']
    #allocation11 [shape = 'u8[4096]{0}', space=vmem, size = 0x1000, scoped, tag = 'input window, operand 8, single buffered']
    #allocation12 [shape = 's32[1]{0}', space=sflag, size = 0x4, scoped, tag = 'scoped memory for tpu_custom_call.1']
    #allocation13 [shape = 'u8[8192]{0}', space=vmem, size = 0x2000, scoped, tag = 'input window, operand 13, single buffered']
    #allocation14 [shape = 'u8[8192]{0}', space=vmem, size = 0x2000, scoped, tag = 'input window, operand 14, single buffered']
    #allocation15 [shape = 's32[1]{0}', space=sflag, size = 0x4, scoped, tag = 'scoped memory for tpu_custom_call.1']
    #allocation16 [shape = 'u8[4096]{0}', space=vmem, size = 0x1000, scoped, tag = 'output window, operand 0']
    %20 = vsyncpa [#allocation3], 0
    %s21 = scalar_lea.sflag [#allocation3], 1
    %22 = vsyncpa %s21, 0
    %23 = vsyncpa [#allocation6], 0
    %s24 = scalar_lea.sflag [#allocation6], 1
    %25 = vsyncpa %s24, 0
    %26 = vsyncpa [#allocation9], 0
    %27 = vsyncpa [#allocation12], 0
    %28 = vsyncpa [#allocation15], 0
    %29 = vsyncpa [#allocation4], 0
    %s30 = scalar_lea.sflag [#allocation4], 1
    %31 = vsyncpa %s30, 0
    loop: start=0, step=1, limit=4
    $region2: #{tpu_custom_call.1} parent=1 // loop_pre_header
      _
    $region3: #{tpu_custom_call.1} parent=1 // loop_header
      %s33 = sphi 0, %s37
      %p34 = scmp.ge.s32.totalorder %s33, 4
      %s43 = sphi 0, %s45
      %s46 = sphi 0, %s43
      %s47 = sphi 0, %s46
      %s63 = sphi 0, %s47
      %s69 = sphi 0, %s71
      %s72 = sphi 0, %s69
      %s73 = sphi 0, %s72
      %s89 = sphi 0, %s73
      %s95 = sphi 0, %s97
      %s98 = sphi 0, %s95
      %s99 = sphi 0, %s98
      %s115 = sphi 0, %s99
      %s121 = sphi 0, %s123
      %s124 = sphi 0, %s121
      %s125 = sphi 0, %s124
      %s141 = sphi 0, %s125
      %s145 = sphi 0, %s145
      %s147 = sphi 0, %s145
      %s148 = sphi 0, %s147
      %s162 = sphi 0, %s148
      %s166 = sphi 0, %s166
      %s168 = sphi 0, %s166
      %s169 = sphi 0, %s168
      %s183 = sphi 0, %s169
      %s187 = sphi 0, %s187
      %s189 = sphi 0, %s187
      %s190 = sphi 0, %s189
      %s204 = sphi 0, %s190
      %s208 = sphi 0, %s208
      %s210 = sphi 0, %s208
      %s211 = sphi 0, %s210
      %s225 = sphi 0, %s211
      %s229 = sphi 0, %s229
      %s231 = sphi 0, %s229
      %s232 = sphi 0, %s231
      %s246 = sphi 0, %s232
      %s250 = sphi 0, %s250
      %s252 = sphi 0, %s250
      %s253 = sphi 0, %s252
      %s267 = sphi 0, %s253
      %s271 = sphi 0, %s271
      %s273 = sphi 0, %s271
      %s274 = sphi 0, %s273
      %s288 = sphi 0, %s274
      %s292 = sphi 0, %s292
      %s294 = sphi 0, %s292
      %s295 = sphi 0, %s294
      %s309 = sphi 0, %s295
      %s313 = sphi 0, %s313
      %s315 = sphi 0, %s313
      %s316 = sphi 0, %s315
      %s330 = sphi 0, %s316
      %s334 = sphi 0, %s334
      %s336 = sphi 0, %s334
      %s337 = sphi 0, %s336
      %s351 = sphi 0, %s337
      %s355 = sphi 0, %s355
      %s357 = sphi 0, %s355
      %s358 = sphi 0, %s357
      %s372 = sphi 0, %s358
      %s378 = sphi 0, %s380
      %s381 = sphi 0, %s378
      %s382 = sphi 0, %s381
      %s398 = sphi 0, %s382
    $region4: #{tpu_custom_call.1} parent=1 // loop_header_branch
      %36 = sbr.rel (%p34) target = $region8
    $region5: #{tpu_custom_call.1} parent=1 // loop_body
      %s38 = ssub.s32 %s33, 1
      %s39 = ssub.s32 %s33, 2
      %s40 = sadd.s32 %s33, 1
      %s41 = ssub.s32 %s33, %s40
      %p42 = scmp.eq.s32.totalorder %s41, 0
      %s44 = sadd.s32 %s43, 1
      %s45 = scalar_select %p42, %s43, %s44
      %p48 = pneg %p42
      %p49 = scmp.eq.s32.totalorder %s33, 1
      %p50 = por %p48, %p49
      %p51 = scmp.ne.s32.totalorder %s43, %s46
      %p52 = scmp.eq.s32.totalorder %s33, 0
      %p53 = por %p51, %p52
      %p54 = scmp.ne.s32.totalorder %s43, %s46
      %p55 = scmp.eq.s32.totalorder %s38, 1
      %p56 = por %p54, %p55
      %p57 = scmp.ne.s32.totalorder %s46, %s47
      %p58 = scmp.eq.s32.totalorder %s38, 0
      %p59 = por %p57, %p58
      %p60 = scmp.ne.s32.totalorder %s46, %s47
      %p61 = scmp.eq.s32.totalorder %s39, 1
      %p62 = por %p60, %p61
      %p64 = scmp.ne.s32.totalorder %s47, %s63
      %p65 = scmp.eq.s32.totalorder %s39, 0
      %p66 = por %p64, %p65
      %s67 = ssub.s32 %s33, %s40
      %p68 = scmp.eq.s32.totalorder %s67, 0
      %s70 = sadd.s32 %s69, 1
      %s71 = scalar_select %p68, %s69, %s70
      %p74 = pneg %p68
      %p75 = scmp.eq.s32.totalorder %s33, 1
      %p76 = por %p74, %p75
      %p77 = scmp.ne.s32.totalorder %s69, %s72
      %p78 = scmp.eq.s32.totalorder %s33, 0
      %p79 = por %p77, %p78
      %p80 = scmp.ne.s32.totalorder %s69, %s72
      %p81 = scmp.eq.s32.totalorder %s38, 1
      %p82 = por %p80, %p81
      %p83 = scmp.ne.s32.totalorder %s72, %s73
      %p84 = scmp.eq.s32.totalorder %s38, 0
      %p85 = por %p83, %p84
      %p86 = scmp.ne.s32.totalorder %s72, %s73
      %p87 = scmp.eq.s32.totalorder %s39, 1
      %p88 = por %p86, %p87
      %p90 = scmp.ne.s32.totalorder %s73, %s89
      %p91 = scmp.eq.s32.totalorder %s39, 0
      %p92 = por %p90, %p91
      %s93 = ssub.s32 %s33, %s40
      %p94 = scmp.eq.s32.totalorder %s93, 0
      %s96 = sadd.s32 %s95, 1
      %s97 = scalar_select %p94, %s95, %s96
      %p100 = pneg %p94
      %p101 = scmp.eq.s32.totalorder %s33, 1
      %p102 = por %p100, %p101
      %p103 = scmp.ne.s32.totalorder %s95, %s98
      %p104 = scmp.eq.s32.totalorder %s33, 0
      %p105 = por %p103, %p104
      %p106 = scmp.ne.s32.totalorder %s95, %s98
      %p107 = scmp.eq.s32.totalorder %s38, 1
      %p108 = por %p106, %p107
      %p109 = scmp.ne.s32.totalorder %s98, %s99
      %p110 = scmp.eq.s32.totalorder %s38, 0
      %p111 = por %p109, %p110
      %p112 = scmp.ne.s32.totalorder %s98, %s99
      %p113 = scmp.eq.s32.totalorder %s39, 1
      %p114 = por %p112, %p113
      %p116 = scmp.ne.s32.totalorder %s99, %s115
      %p117 = scmp.eq.s32.totalorder %s39, 0
      %p118 = por %p116, %p117
      %s119 = ssub.s32 %s33, %s40
      %p120 = scmp.eq.s32.totalorder %s119, 0
      %s122 = sadd.s32 %s121, 1
      %s123 = scalar_select %p120, %s121, %s122
      %p126 = pneg %p120
      %p127 = scmp.eq.s32.totalorder %s33, 1
      %p128 = por %p126, %p127
      %p129 = scmp.ne.s32.totalorder %s121, %s124
      %p130 = scmp.eq.s32.totalorder %s33, 0
      %p131 = por %p129, %p130
      %p132 = scmp.ne.s32.totalorder %s121, %s124
      %p133 = scmp.eq.s32.totalorder %s38, 1
      %p134 = por %p132, %p133
      %p135 = scmp.ne.s32.totalorder %s124, %s125
      %p136 = scmp.eq.s32.totalorder %s38, 0
      %p137 = por %p135, %p136
      %p138 = scmp.ne.s32.totalorder %s124, %s125
      %p139 = scmp.eq.s32.totalorder %s39, 1
      %p140 = por %p138, %p139
      %p142 = scmp.ne.s32.totalorder %s125, %s141
      %p143 = scmp.eq.s32.totalorder %s39, 0
      %p144 = por %p142, %p143
      %s146 = sadd.s32 %s145, 1
      %p149 = scmp.eq.s32.totalorder %s33, 1
      %p150 = scmp.ne.s32.totalorder %s145, %s147
      %p151 = scmp.eq.s32.totalorder %s33, 0
      %p152 = por %p150, %p151
      %p153 = scmp.ne.s32.totalorder %s145, %s147
      %p154 = scmp.eq.s32.totalorder %s38, 1
      %p155 = por %p153, %p154
      %p156 = scmp.ne.s32.totalorder %s147, %s148
      %p157 = scmp.eq.s32.totalorder %s38, 0
      %p158 = por %p156, %p157
      %p159 = scmp.ne.s32.totalorder %s147, %s148
      %p160 = scmp.eq.s32.totalorder %s39, 1
      %p161 = por %p159, %p160
      %p163 = scmp.ne.s32.totalorder %s148, %s162
      %p164 = scmp.eq.s32.totalorder %s39, 0
      %p165 = por %p163, %p164
      %s167 = sadd.s32 %s166, 1
      %p170 = scmp.eq.s32.totalorder %s33, 1
      %p171 = scmp.ne.s32.totalorder %s166, %s168
      %p172 = scmp.eq.s32.totalorder %s33, 0
      %p173 = por %p171, %p172
      %p174 = scmp.ne.s32.totalorder %s166, %s168
      %p175 = scmp.eq.s32.totalorder %s38, 1
      %p176 = por %p174, %p175
      %p177 = scmp.ne.s32.totalorder %s168, %s169
      %p178 = scmp.eq.s32.totalorder %s38, 0
      %p179 = por %p177, %p178
      %p180 = scmp.ne.s32.totalorder %s168, %s169
      %p181 = scmp.eq.s32.totalorder %s39, 1
      %p182 = por %p180, %p181
      %p184 = scmp.ne.s32.totalorder %s169, %s183
      %p185 = scmp.eq.s32.totalorder %s39, 0
      %p186 = por %p184, %p185
      %s188 = sadd.s32 %s187, 1
      %p191 = scmp.eq.s32.totalorder %s33, 1
      %p192 = scmp.ne.s32.totalorder %s187, %s189
      %p193 = scmp.eq.s32.totalorder %s33, 0
      %p194 = por %p192, %p193
      %p195 = scmp.ne.s32.totalorder %s187, %s189
      %p196 = scmp.eq.s32.totalorder %s38, 1
      %p197 = por %p195, %p196
      %p198 = scmp.ne.s32.totalorder %s189, %s190
      %p199 = scmp.eq.s32.totalorder %s38, 0
      %p200 = por %p198, %p199
      %p201 = scmp.ne.s32.totalorder %s189, %s190
      %p202 = scmp.eq.s32.totalorder %s39, 1
      %p203 = por %p201, %p202
      %p205 = scmp.ne.s32.totalorder %s190, %s204
      %p206 = scmp.eq.s32.totalorder %s39, 0
      %p207 = por %p205, %p206
      %s209 = sadd.s32 %s208, 1
      %p212 = scmp.eq.s32.totalorder %s33, 1
      %p213 = scmp.ne.s32.totalorder %s208, %s210
      %p214 = scmp.eq.s32.totalorder %s33, 0
      %p215 = por %p213, %p214
      %p216 = scmp.ne.s32.totalorder %s208, %s210
      %p217 = scmp.eq.s32.totalorder %s38, 1
      %p218 = por %p216, %p217
      %p219 = scmp.ne.s32.totalorder %s210, %s211
      %p220 = scmp.eq.s32.totalorder %s38, 0
      %p221 = por %p219, %p220
      %p222 = scmp.ne.s32.totalorder %s210, %s211
      %p223 = scmp.eq.s32.totalorder %s39, 1
      %p224 = por %p222, %p223
      %p226 = scmp.ne.s32.totalorder %s211, %s225
      %p227 = scmp.eq.s32.totalorder %s39, 0
      %p228 = por %p226, %p227
      %s230 = sadd.s32 %s229, 1
      %p233 = scmp.eq.s32.totalorder %s33, 1
      %p234 = scmp.ne.s32.totalorder %s229, %s231
      %p235 = scmp.eq.s32.totalorder %s33, 0
      %p236 = por %p234, %p235
      %p237 = scmp.ne.s32.totalorder %s229, %s231
      %p238 = scmp.eq.s32.totalorder %s38, 1
      %p239 = por %p237, %p238
      %p240 = scmp.ne.s32.totalorder %s231, %s232
      %p241 = scmp.eq.s32.totalorder %s38, 0
      %p242 = por %p240, %p241
      %p243 = scmp.ne.s32.totalorder %s231, %s232
      %p244 = scmp.eq.s32.totalorder %s39, 1
      %p245 = por %p243, %p244
      %p247 = scmp.ne.s32.totalorder %s232, %s246
      %p248 = scmp.eq.s32.totalorder %s39, 0
      %p249 = por %p247, %p248
      %s251 = sadd.s32 %s250, 1
      %p254 = scmp.eq.s32.totalorder %s33, 1
      %p255 = scmp.ne.s32.totalorder %s250, %s252
      %p256 = scmp.eq.s32.totalorder %s33, 0
      %p257 = por %p255, %p256
      %p258 = scmp.ne.s32.totalorder %s250, %s252
      %p259 = scmp.eq.s32.totalorder %s38, 1
      %p260 = por %p258, %p259
      %p261 = scmp.ne.s32.totalorder %s252, %s253
      %p262 = scmp.eq.s32.totalorder %s38, 0
      %p263 = por %p261, %p262
      %p264 = scmp.ne.s32.totalorder %s252, %s253
      %p265 = scmp.eq.s32.totalorder %s39, 1
      %p266 = por %p264, %p265
      %p268 = scmp.ne.s32.totalorder %s253, %s267
      %p269 = scmp.eq.s32.totalorder %s39, 0
      %p270 = por %p268, %p269
      %s272 = sadd.s32 %s271, 1
      %p275 = scmp.eq.s32.totalorder %s33, 1
      %p276 = scmp.ne.s32.totalorder %s271, %s273
      %p277 = scmp.eq.s32.totalorder %s33, 0
      %p278 = por %p276, %p277
      %p279 = scmp.ne.s32.totalorder %s271, %s273
      %p280 = scmp.eq.s32.totalorder %s38, 1
      %p281 = por %p279, %p280
      %p282 = scmp.ne.s32.totalorder %s273, %s274
      %p283 = scmp.eq.s32.totalorder %s38, 0
      %p284 = por %p282, %p283
      %p285 = scmp.ne.s32.totalorder %s273, %s274
      %p286 = scmp.eq.s32.totalorder %s39, 1
      %p287 = por %p285, %p286
      %p289 = scmp.ne.s32.totalorder %s274, %s288
      %p290 = scmp.eq.s32.totalorder %s39, 0
      %p291 = por %p289, %p290
      %s293 = sadd.s32 %s292, 1
      %p296 = scmp.eq.s32.totalorder %s33, 1
      %p297 = scmp.ne.s32.totalorder %s292, %s294
      %p298 = scmp.eq.s32.totalorder %s33, 0
      %p299 = por %p297, %p298
      %p300 = scmp.ne.s32.totalorder %s292, %s294
      %p301 = scmp.eq.s32.totalorder %s38, 1
      %p302 = por %p300, %p301
      %p303 = scmp.ne.s32.totalorder %s294, %s295
      %p304 = scmp.eq.s32.totalorder %s38, 0
      %p305 = por %p303, %p304
      %p306 = scmp.ne.s32.totalorder %s294, %s295
      %p307 = scmp.eq.s32.totalorder %s39, 1
      %p308 = por %p306, %p307
      %p310 = scmp.ne.s32.totalorder %s295, %s309
      %p311 = scmp.eq.s32.totalorder %s39, 0
      %p312 = por %p310, %p311
      %s314 = sadd.s32 %s313, 1
      %p317 = scmp.eq.s32.totalorder %s33, 1
      %p318 = scmp.ne.s32.totalorder %s313, %s315
      %p319 = scmp.eq.s32.totalorder %s33, 0
      %p320 = por %p318, %p319
      %p321 = scmp.ne.s32.totalorder %s313, %s315
      %p322 = scmp.eq.s32.totalorder %s38, 1
      %p323 = por %p321, %p322
      %p324 = scmp.ne.s32.totalorder %s315, %s316
      %p325 = scmp.eq.s32.totalorder %s38, 0
      %p326 = por %p324, %p325
      %p327 = scmp.ne.s32.totalorder %s315, %s316
      %p328 = scmp.eq.s32.totalorder %s39, 1
      %p329 = por %p327, %p328
      %p331 = scmp.ne.s32.totalorder %s316, %s330
      %p332 = scmp.eq.s32.totalorder %s39, 0
      %p333 = por %p331, %p332
      %s335 = sadd.s32 %s334, 1
      %p338 = scmp.eq.s32.totalorder %s33, 1
      %p339 = scmp.ne.s32.totalorder %s334, %s336
      %p340 = scmp.eq.s32.totalorder %s33, 0
      %p341 = por %p339, %p340
      %p342 = scmp.ne.s32.totalorder %s334, %s336
      %p343 = scmp.eq.s32.totalorder %s38, 1
      %p344 = por %p342, %p343
      %p345 = scmp.ne.s32.totalorder %s336, %s337
      %p346 = scmp.eq.s32.totalorder %s38, 0
      %p347 = por %p345, %p346
      %p348 = scmp.ne.s32.totalorder %s336, %s337
      %p349 = scmp.eq.s32.totalorder %s39, 1
      %p350 = por %p348, %p349
      %p352 = scmp.ne.s32.totalorder %s337, %s351
      %p353 = scmp.eq.s32.totalorder %s39, 0
      %p354 = por %p352, %p353
      %s356 = sadd.s32 %s355, 1
      %p359 = scmp.eq.s32.totalorder %s33, 1
      %p360 = scmp.ne.s32.totalorder %s355, %s357
      %p361 = scmp.eq.s32.totalorder %s33, 0
      %p362 = por %p360, %p361
      %p363 = scmp.ne.s32.totalorder %s355, %s357
      %p364 = scmp.eq.s32.totalorder %s38, 1
      %p365 = por %p363, %p364
      %p366 = scmp.ne.s32.totalorder %s357, %s358
      %p367 = scmp.eq.s32.totalorder %s38, 0
      %p368 = por %p366, %p367
      %p369 = scmp.ne.s32.totalorder %s357, %s358
      %p370 = scmp.eq.s32.totalorder %s39, 1
      %p371 = por %p369, %p370
      %p373 = scmp.ne.s32.totalorder %s358, %s372
      %p374 = scmp.eq.s32.totalorder %s39, 0
      %p375 = por %p373, %p374
      %s376 = ssub.s32 %s33, %s40
      %p377 = scmp.eq.s32.totalorder %s376, 0
      %s379 = sadd.s32 %s378, 1
      %s380 = scalar_select %p377, %s378, %s379
      %p383 = pneg %p377
      %p384 = scmp.eq.s32.totalorder %s33, 1
      %p385 = por %p383, %p384
      %p386 = scmp.ne.s32.totalorder %s378, %s381
      %p387 = scmp.eq.s32.totalorder %s33, 0
      %p388 = por %p386, %p387
      %p389 = scmp.ne.s32.totalorder %s378, %s381
      %p390 = scmp.eq.s32.totalorder %s38, 1
      %p391 = por %p389, %p390
      %p392 = scmp.ne.s32.totalorder %s381, %s382
      %p393 = scmp.eq.s32.totalorder %s38, 0
      %p394 = por %p392, %p393
      %p395 = scmp.ne.s32.totalorder %s381, %s382
      %p396 = scmp.eq.s32.totalorder %s39, 1
      %p397 = por %p395, %p396
      %p399 = scmp.ne.s32.totalorder %s382, %s398
      %p400 = scmp.eq.s32.totalorder %s39, 0
      %p401 = por %p399, %p400
      %p402 = scmp.le.s32.totalorder 1, %s33
      %p403 = scmp.lt.s32.totalorder %s33, 3
      %p404 = pnand %p402, %p403
      %p405 = pneg %p404
      // Predicated region
      $region9: #{tpu_custom_call.1} parent=5 // pred_check
        _
      $region10: #{tpu_custom_call.1} parent=5 // pred_check_branch
        %407 = sbr.rel (%p404) target = $region12
      $region11: #{tpu_custom_call.1} parent=5 // pred_region
        %s408 = ssub.s32 %s33, 1
        // Predicated region
        $region13: #{tpu_custom_call.1} parent=11 // pred_check
          %p409 = pneg %p158
        $region14: #{tpu_custom_call.1} parent=11 // pred_check_branch
          %411 = sbr.rel (%p409) target = $region16
        $region15: #{tpu_custom_call.1} parent=11 // pred_region
          _
        $region16: #{tpu_custom_call.1} parent=11 // pred_fallthru
          _
        // Predicated region
        $region17: #{tpu_custom_call.1} parent=11 // pred_check
          %p412 = pneg %p179
        $region18: #{tpu_custom_call.1} parent=11 // pred_check_branch
          %414 = sbr.rel (%p412) target = $region20
        $region19: #{tpu_custom_call.1} parent=11 // pred_region
          _
        $region20: #{tpu_custom_call.1} parent=11 // pred_fallthru
          _
        // Predicated region
        $region21: #{tpu_custom_call.1} parent=11 // pred_check
          %p415 = pneg %p200
        $region22: #{tpu_custom_call.1} parent=11 // pred_check_branch
          %417 = sbr.rel (%p415) target = $region24
        $region23: #{tpu_custom_call.1} parent=11 // pred_region
          %s419 = ssub.s32 16, 16
          %420 = vsyncadd [#allocation9], %s419
          %s422 = sshll.u32 [#allocation8], 4
          %s423 = int_to_ptr.vmem [resolvable:$true] %s422
          %425 = dma.hbm_to_vmem [thread:$0]  %s6, 16, %s423, [#allocation9]
        $region24: #{tpu_custom_call.1} parent=11 // pred_fallthru
          _
        // Predicated region
        $region25: #{tpu_custom_call.1} parent=11 // pred_check
          %p426 = pneg %p221
        $region26: #{tpu_custom_call.1} parent=11 // pred_check_branch
          %428 = sbr.rel (%p426) target = $region28
        $region27: #{tpu_custom_call.1} parent=11 // pred_region
          %s430 = ssub.s32 128, 128
          %431 = vsyncadd [#allocation9], %s430
          %s432 = sshll.u32 [#allocation10], 4
          %s433 = int_to_ptr.vmem [resolvable:$true] %s432
          %438 = dma.hbm_to_vmem [thread:$0]  %s7, 128, %s433, [#allocation9], 64, 64, 4
        $region28: #{tpu_custom_call.1} parent=11 // pred_fallthru
          _
        // Predicated region
        $region29: #{tpu_custom_call.1} parent=11 // pred_check
          %p439 = pneg %p242
        $region30: #{tpu_custom_call.1} parent=11 // pred_check_branch
          %441 = sbr.rel (%p439) target = $region32
        $region31: #{tpu_custom_call.1} parent=11 // pred_region
          %s443 = ssub.s32 128, 128
          %444 = vsyncadd [#allocation12], %s443
          %s445 = sshll.u32 [#allocation11], 4
          %s446 = int_to_ptr.vmem [resolvable:$true] %s445
          %451 = dma.hbm_to_vmem [thread:$0]  %s8, 128, %s446, [#allocation12], 64, 64, 4
        $region32: #{tpu_custom_call.1} parent=11 // pred_fallthru
          _
        // Predicated region
        $region33: #{tpu_custom_call.1} parent=11 // pred_check
          %p452 = pneg %p263
        $region34: #{tpu_custom_call.1} parent=11 // pred_check_branch
          %454 = sbr.rel (%p452) target = $region36
        $region35: #{tpu_custom_call.1} parent=11 // pred_region
          _
        $region36: #{tpu_custom_call.1} parent=11 // pred_fallthru
          _
        // Predicated region
        $region37: #{tpu_custom_call.1} parent=11 // pred_check
          %p455 = pneg %p284
        $region38: #{tpu_custom_call.1} parent=11 // pred_check_branch
          %457 = sbr.rel (%p455) target = $region40
        $region39: #{tpu_custom_call.1} parent=11 // pred_region
          _
        $region40: #{tpu_custom_call.1} parent=11 // pred_fallthru
          _
        // Predicated region
        $region41: #{tpu_custom_call.1} parent=11 // pred_check
          %p458 = pneg %p305
        $region42: #{tpu_custom_call.1} parent=11 // pred_check_branch
          %460 = sbr.rel (%p458) target = $region44
        $region43: #{tpu_custom_call.1} parent=11 // pred_region
          _
        $region44: #{tpu_custom_call.1} parent=11 // pred_fallthru
          _
        // Predicated region
        $region45: #{tpu_custom_call.1} parent=11 // pred_check
          %p461 = pneg %p326
        $region46: #{tpu_custom_call.1} parent=11 // pred_check_branch
          %463 = sbr.rel (%p461) target = $region48
        $region47: #{tpu_custom_call.1} parent=11 // pred_region
          _
        $region48: #{tpu_custom_call.1} parent=11 // pred_fallthru
          _
        // Predicated region
        $region49: #{tpu_custom_call.1} parent=11 // pred_check
          %p464 = pneg %p347
        $region50: #{tpu_custom_call.1} parent=11 // pred_check_branch
          %466 = sbr.rel (%p464) target = $region52
        $region51: #{tpu_custom_call.1} parent=11 // pred_region
          %s468 = ssub.s32 256, 256
          %469 = vsyncadd [#allocation12], %s468
          %s470 = sshll.u32 [#allocation13], 4
          %s471 = int_to_ptr.vmem [resolvable:$true] %s470
          %476 = dma.hbm_to_vmem [thread:$0]  %s13, 256, %s471, [#allocation12], 128, 128, 8
        $region52: #{tpu_custom_call.1} parent=11 // pred_fallthru
          _
        // Predicated region
        $region53: #{tpu_custom_call.1} parent=11 // pred_check
          %p477 = pneg %p368
        $region54: #{tpu_custom_call.1} parent=11 // pred_check_branch
          %479 = sbr.rel (%p477) target = $region56
        $region55: #{tpu_custom_call.1} parent=11 // pred_region
          %s481 = ssub.s32 256, 256
          %482 = vsyncadd [#allocation15], %s481
          %s483 = sshll.u32 [#allocation14], 4
          %s484 = int_to_ptr.vmem [resolvable:$true] %s483
          %489 = dma.hbm_to_vmem [thread:$0]  %s14, 256, %s484, [#allocation15], 64, 64, 4
        $region56: #{tpu_custom_call.1} parent=11 // pred_fallthru
          _
      $region12: #{tpu_custom_call.1} parent=5 // pred_fallthru
        _
      %p490 = scmp.lt.s32.totalorder %s33, 2
      // Predicated region
      $region57: #{tpu_custom_call.1} parent=5 // pred_check
        %p491 = pneg %p490
      $region58: #{tpu_custom_call.1} parent=5 // pred_check_branch
        %493 = sbr.rel (%p491) target = $region60
      $region59: #{tpu_custom_call.1} parent=5 // pred_region
        // Predicated region
        $region61: #{tpu_custom_call.1} parent=59 // pred_check
          %p494 = pneg %p53
        $region62: #{tpu_custom_call.1} parent=59 // pred_check_branch
          %496 = sbr.rel (%p494) target = $region64
        $region63: #{tpu_custom_call.1} parent=59 // pred_region
          %s497 = sand.u32 %s43, 1
          %s498 = scalar_lea.sflag [#allocation3], %s497
          %s499 = sand.u32 %s43, 1
          %s500 = smul.addr %s499, 4
          %s501 = scalar_lea.vmem [#allocation2], %s500
          %s503 = ssub.s32 64, 64
          %504 = vsyncadd %s498, %s503
          %s505 = smul.addr %s33, 64
          %s506 = scalar_lea.hbm %s0, %s505
          %s508 = sshll.u32 %s501, 4
          %s509 = int_to_ptr.vmem [resolvable:$true] %s508
          %511 = dma.hbm_to_vmem [thread:$0]  %s506, 64, %s509, %s498
        $region64: #{tpu_custom_call.1} parent=59 // pred_fallthru
          _
        // Predicated region
        $region65: #{tpu_custom_call.1} parent=59 // pred_check
          %p512 = pneg %p79
        $region66: #{tpu_custom_call.1} parent=59 // pred_check_branch
          %514 = sbr.rel (%p512) target = $region68
        $region67: #{tpu_custom_call.1} parent=59 // pred_region
          %s515 = sand.u32 %s33, 1
          %s516 = scalar_lea.sflag [#allocation6], %s515
          %s517 = sand.u32 %s69, 1
          %s518 = smul.addr %s517, 4
          %s519 = scalar_lea.vmem [#allocation5], %s518
          %s521 = ssub.s32 64, 64
          %522 = vsyncadd %s516, %s521
          %s523 = smul.addr %s33, 64
          %s524 = scalar_lea.hbm %s1, %s523
          %s526 = sshll.u32 %s519, 4
          %s527 = int_to_ptr.vmem [resolvable:$true] %s526
          %529 = dma.hbm_to_vmem [thread:$0]  %s524, 64, %s527, %s516
        $region68: #{tpu_custom_call.1} parent=59 // pred_fallthru
          _
        // Predicated region
        $region69: #{tpu_custom_call.1} parent=59 // pred_check
          %p530 = pneg %p105
        $region70: #{tpu_custom_call.1} parent=59 // pred_check_branch
          %532 = sbr.rel (%p530) target = $region72
        $region71: #{tpu_custom_call.1} parent=59 // pred_region
          %s533 = sand.u32 %s33, 1
          %s534 = scalar_lea.sflag [#allocation6], %s533
          %s535 = sand.u32 %s95, 1
          %s536 = smul.addr %s535, 4
          %s537 = scalar_lea.vmem [#allocation7], %s536
          %s539 = ssub.s32 64, 64
          %540 = vsyncadd %s534, %s539
          %s541 = smul.addr %s33, 64
          %s542 = scalar_lea.hbm %s2, %s541
          %s544 = sshll.u32 %s537, 4
          %s545 = int_to_ptr.vmem [resolvable:$true] %s544
          %547 = dma.hbm_to_vmem [thread:$0]  %s542, 64, %s545, %s534
        $region72: #{tpu_custom_call.1} parent=59 // pred_fallthru
          _
        // Predicated region
        $region73: #{tpu_custom_call.1} parent=59 // pred_check
          %p548 = pneg %p131
        $region74: #{tpu_custom_call.1} parent=59 // pred_check_branch
          %550 = sbr.rel (%p548) target = $region76
        $region75: #{tpu_custom_call.1} parent=59 // pred_region
          %p551 = scmp.lt.s32.totalorder %s33, 1
          %s552 = scalar_select %p551, %s33, 1
          %s553 = smul.addr %s552, 8
          %s554 = scalar_lea.vmem %s3, %s553
        $region76: #{tpu_custom_call.1} parent=59 // pred_fallthru
          _
      $region60: #{tpu_custom_call.1} parent=5 // pred_fallthru
        _
      %p555 = scmp.le.s32.totalorder 1, %s33
      %p556 = scmp.lt.s32.totalorder %s33, 3
      %p557 = pnand %p555, %p556
      %p558 = pneg %p557
      // Predicated region
      $region77: #{tpu_custom_call.1} parent=5 // pred_check
        _
      $region78: #{tpu_custom_call.1} parent=5 // pred_check_branch
        %560 = sbr.rel (%p557) target = $region80
      $region79: #{tpu_custom_call.1} parent=5 // pred_region
        %s561 = ssub.s32 %s33, 1
        %s562 = sand.u32 %s46, 1
        %s563 = scalar_lea.sflag [#allocation3], %s562
        %s564 = sand.u32 %s46, 1
        %s565 = smul.addr %s564, 4
        %s566 = scalar_lea.vmem [#allocation2], %s565
        // Predicated region
        $region81: #{tpu_custom_call.1} parent=79 // pred_check
          %p567 = pneg %p59
        $region82: #{tpu_custom_call.1} parent=79 // pred_check_branch
          %569 = sbr.rel (%p567) target = $region84
        $region83: #{tpu_custom_call.1} parent=79 // pred_region
          %570 = dma.done %s563, 64
        $region84: #{tpu_custom_call.1} parent=79 // pred_fallthru
          _
        %s571 = sand.u32 %s38, 1
        %s572 = scalar_lea.sflag [#allocation6], %s571
        %s573 = sand.u32 %s72, 1
        %s574 = smul.addr %s573, 4
        %s575 = scalar_lea.vmem [#allocation5], %s574
        // Predicated region
        $region85: #{tpu_custom_call.1} parent=79 // pred_check
          %p576 = pneg %p85
        $region86: #{tpu_custom_call.1} parent=79 // pred_check_branch
          %578 = sbr.rel (%p576) target = $region88
        $region87: #{tpu_custom_call.1} parent=79 // pred_region
          %579 = dma.done %s572, 64
        $region88: #{tpu_custom_call.1} parent=79 // pred_fallthru
          _
        %s580 = sand.u32 %s38, 1
        %s581 = scalar_lea.sflag [#allocation6], %s580
        %s582 = sand.u32 %s98, 1
        %s583 = smul.addr %s582, 4
        %s584 = scalar_lea.vmem [#allocation7], %s583
        // Predicated region
        $region89: #{tpu_custom_call.1} parent=79 // pred_check
          %p585 = pneg %p111
        $region90: #{tpu_custom_call.1} parent=79 // pred_check_branch
          %587 = sbr.rel (%p585) target = $region92
        $region91: #{tpu_custom_call.1} parent=79 // pred_region
          %588 = dma.done %s581, 64
        $region92: #{tpu_custom_call.1} parent=79 // pred_fallthru
          _
        // Predicated region
        $region93: #{tpu_custom_call.1} parent=79 // pred_check
          %p589 = pneg %p200
        $region94: #{tpu_custom_call.1} parent=79 // pred_check_branch
          %591 = sbr.rel (%p589) target = $region96
        $region95: #{tpu_custom_call.1} parent=79 // pred_region
          %592 = dma.done [#allocation9], 16
        $region96: #{tpu_custom_call.1} parent=79 // pred_fallthru
          _
        // Predicated region
        $region97: #{tpu_custom_call.1} parent=79 // pred_check
          %p593 = pneg %p221
        $region98: #{tpu_custom_call.1} parent=79 // pred_check_branch
          %595 = sbr.rel (%p593) target = $region100
        $region99: #{tpu_custom_call.1} parent=79 // pred_region
          %596 = dma.done [#allocation9], 128
        $region100: #{tpu_custom_call.1} parent=79 // pred_fallthru
          _
        // Predicated region
        $region101: #{tpu_custom_call.1} parent=79 // pred_check
          %p597 = pneg %p242
        $region102: #{tpu_custom_call.1} parent=79 // pred_check_branch
          %599 = sbr.rel (%p597) target = $region104
        $region103: #{tpu_custom_call.1} parent=79 // pred_region
          %600 = dma.done [#allocation12], 128
        $region104: #{tpu_custom_call.1} parent=79 // pred_fallthru
          _
        // Predicated region
        $region105: #{tpu_custom_call.1} parent=79 // pred_check
          %p601 = pneg %p347
        $region106: #{tpu_custom_call.1} parent=79 // pred_check_branch
          %603 = sbr.rel (%p601) target = $region108
        $region107: #{tpu_custom_call.1} parent=79 // pred_region
          %604 = dma.done [#allocation12], 256
        $region108: #{tpu_custom_call.1} parent=79 // pred_fallthru
          _
        // Predicated region
        $region109: #{tpu_custom_call.1} parent=79 // pred_check
          %p605 = pneg %p368
        $region110: #{tpu_custom_call.1} parent=79 // pred_check_branch
          %607 = sbr.rel (%p605) target = $region112
        $region111: #{tpu_custom_call.1} parent=79 // pred_region
          %608 = dma.done [#allocation15], 256
        $region112: #{tpu_custom_call.1} parent=79 // pred_fallthru
          _
        %s609 = sand.u32 %s46, 1
        %s610 = scalar_lea.sflag [#allocation3], %s609
        %s611 = sand.u32 %s46, 1
        %s612 = smul.addr %s611, 4
        %s613 = scalar_lea.vmem [#allocation2], %s612
        %p614 = pneg %p59
        %p615 = pneg %p56
        %s616 = sand.u32 %s38, 1
        %s617 = scalar_lea.sflag [#allocation6], %s616
        %s618 = sand.u32 %s72, 1
        %s619 = smul.addr %s618, 4
        %s620 = scalar_lea.vmem [#allocation5], %s619
        %p621 = pneg %p85
        %p622 = pneg %p82
        %s623 = sand.u32 %s38, 1
        %s624 = scalar_lea.sflag [#allocation6], %s623
        %s625 = sand.u32 %s98, 1
        %s626 = smul.addr %s625, 4
        %s627 = scalar_lea.vmem [#allocation7], %s626
        %p628 = pneg %p111
        %p629 = pneg %p108
        %p630 = scmp.lt.s32.totalorder %s38, 1
        %s631 = scalar_select %p630, %s38, 1
        %s632 = smul.addr %s631, 8
        %s633 = scalar_lea.vmem %s3, %s632
        %p634 = pneg %p137
        %p635 = pneg %p134
        %p636 = pneg %p158
        %p637 = pneg %p155
        %p638 = pneg %p179
        %p639 = pneg %p176
        %p640 = pneg %p200
        %p641 = pneg %p197
        %p642 = pneg %p221
        %p643 = pneg %p218
        %p644 = pneg %p242
        %p645 = pneg %p239
        %p646 = pneg %p263
        %p647 = pneg %p260
        %p648 = pneg %p284
        %p649 = pneg %p281
        %p650 = pneg %p305
        %p651 = pneg %p302
        %p652 = pneg %p326
        %p653 = pneg %p323
        %p654 = pneg %p347
        %p655 = pneg %p344
        %p656 = pneg %p368
        %p657 = pneg %p365
        %p658 = pneg %p394
        %p659 = pneg %p391
        %s660 = sand.u32 %s381, 1
        %s661 = scalar_lea.sflag [#allocation4], %s660
        %s662 = sand.u32 %s381, 1
        %s663 = smul.addr %s662, 4
        %s664 = scalar_lea.vmem [#allocation16], %s663
        %p665 = scmp.lt.s32.totalorder %s38, 1
        %s666 = scalar_select %p665, %s38, 1
        %s667 = smul.addr %s666, 8
        %s668 = scalar_lea.vmem %s3, %s667
        %v670 = vld [vmem:[#allocation13] sm:$0x1]
        %v671 = vld [vmem:[#allocation13 + $0x1] sm:$0x1]
        %v672 = vld [vmem:[#allocation13 + $0x2] sm:$0x1]
        %v673 = vld [vmem:[#allocation13 + $0x3] sm:$0x1]
        %v674 = vld [vmem:[#allocation13 + $0x4] sm:$0x1]
        %v675 = vld [vmem:[#allocation13 + $0x5] sm:$0x1]
        %v676 = vld [vmem:[#allocation13 + $0x6] sm:$0x1]
        %v677 = vld [vmem:[#allocation13 + $0x7] sm:$0x1]
        %v678 = vld [vmem:[#allocation13 + $0x8] sm:$0x1]
        %v679 = vld [vmem:[%s566] sm:$0xf]
        %v680 = vld [vmem:[%s668] sm:$0xff]
        %v681 = vunpack.c.l.bf16 %v679
        %v682 = vld [vmem:[%s4] sm:$0xf]
        %v683 = vld [vmem:[%s4 + $0x4] sm:$0xf]
        %v684 = vld [vmem:[%s4 + $0x8] sm:$0xf]
        %v685 = vld [vmem:[%s4 + $0xc] sm:$0xf]
        %vm686 = vcmask 7168
        %v687 = vsel %vm686, %v680, 0.0
        %v688 = vrot.slane %v687, 4
        %v689 = vadd.f32 %v687, %v688
        %v690 = vrot.slane %v689, 2
        %v691 = vadd.f32 %v689, %v690
        %v692 = vrot.slane %v691, 1
        %v693 = vadd.f32 %v691, %v692
        %v694 = vmax.f32 %v693, 1e-06
        %v695 = vrcp.pop %v694
        %697 = vset.pattern.permute.xlu0 0
        %698 = vperm.xlu0 %697, %v680
        %v699 = vpop.permute.xlu0 %698
        %v701 = vmul.f32 %v681, %v699
        %vm702 = vcmask 261120
        %v703 = vsel %vm702, %v701, 0.0
        %v704 = vrot.slane %v703, 4
        %v705 = vadd.f32 %v703, %v704
        %v706 = vrot.slane %v705, 2
        %v707 = vadd.f32 %v705, %v706
        %v708 = vrot.slane %v707, 1
        %v709 = vadd.f32 %v707, %v708
        %711 = vset.pattern.permute.xlu0 0
        %712 = vperm.xlu0 %711, %v695
        %v713 = vpop.permute.xlu0 %712
        %v715 = vmul.f32 %v709, %v713
        %v716 = vld [vmem:[%s575] sm:$0xf]
        %v717 = vlaneseq
        %v718 = vshrl.u32 %v717, 7
        %v719 = vsub.s32 0, %v718
        %v720 = vrot.slane %v670, %v719
        %v725 = vunpack.c.l.b16 %v682
        %v726 = vunpack.c.l.b16 %v683
        %v727 = vunpack.c.l.b16 %v684
        %v728 = vunpack.c.l.b16 %v685
        %v729 = vpack.c.b16 %v726, %v725
        %v730 = vpack.c.b16 %v728, %v727
        %v734 = vsel %vm702, %v716, 0
        %736 = vmatprep.subr.bf16.mxu0 0
        %737 = vmatpush1.bf16.msra.mxu0 %v729
        %738 = vmatprep.subr.bf16.mxu0 0
        %739 = vmatpush1.bf16.msra.mxu0 %v730
        %740 = vmatprep.subr.bf16.mxu0 0
        %741 = vmatpush1.bf16.msra.mxu0 0
        %742 = vmatprep.subr.bf16.mxu0 0
        %743 = vmatpush1.bf16.msra.mxu0 0
        %744 = vmatprep.subr.bf16.mxu0 0
        %745 = vmatpush1.bf16.msra.mxu0 0
        %746 = vmatprep.subr.bf16.mxu0 0
        %747 = vmatpush1.bf16.msra.mxu0 0
        %748 = vmatprep.subr.bf16.mxu0 0
        %749 = vmatpush1.bf16.msra.mxu0 0
        %750 = vmatprep.subr.bf16.mxu0 0
        %751 = vmatpush1.bf16.msra.mxu0 0
        %752 = vmatprep.subr.bf16.mxu0 0
        %753 = vmatpush1.bf16.msra.mxu0 0
        %754 = vmatprep.subr.bf16.mxu0 0
        %755 = vmatpush1.bf16.msra.mxu0 0
        %756 = vmatprep.subr.bf16.mxu0 0
        %757 = vmatpush1.bf16.msra.mxu0 0
        %758 = vmatprep.subr.bf16.mxu0 0
        %759 = vmatpush1.bf16.msra.mxu0 0
        %760 = vmatprep.subr.bf16.mxu0 0
        %761 = vmatpush1.bf16.msra.mxu0 0
        %762 = vmatprep.subr.bf16.mxu0 0
        %763 = vmatpush1.bf16.msra.mxu0 0
        %764 = vmatprep.subr.bf16.mxu0 0
        %765 = vmatpush1.bf16.msra.mxu0 0
        %766 = vmatprep.subr.bf16.mxu0 0
        %767 = vmatpush1.bf16.msra.mxu0 0
        %768 = vmatprep.mubr.bf16.mxu0 0
        %769 = vmatmul.mubr.bf16.gmra.mrb[0].mxu0 %v734
        %v770 = vpop.f32.mrb[0].mxu0
        %v771 = vadd.f32 %v720, %v770
        %v772 = vpop.f32.mrb[0].mxu0
        %v773 = vpop.f32.mrb[0].mxu0
        %v774 = vpop.f32.mrb[0].mxu0
        %775 = vdwg.mxu0
        %vm776 = vcmp.gt.f32.partialorder %v771, 0.0
        %v777 = vmin.f32 %v771, 0.0
        %v778 = vmul.f32 %v777, 0.7692308
        %v779 = vmul.f32 %v778, 1.442695
        %v780 = vpow.pop %v779
        %v781 = vsub.f32 %v780, 1.0
        %v782 = vmul.f32 %v781, 1.3
        %v783 = vsel %vm776, %v771, %v782
        %v784 = vld [vmem:[#allocation14] sm:$0xf]
        %v785 = vld [vmem:[#allocation14 + $0x4] sm:$0xf]
        %v786 = vld [vmem:[#allocation14 + $0x8] sm:$0xf]
        %v787 = vld [vmem:[#allocation14 + $0xc] sm:$0xf]
        %v788 = vpack.c.bf16 %v783, %v783
        %v793 = vunpack.c.l.b16 %v784
        %v794 = vunpack.c.l.b16 %v785
        %v795 = vunpack.c.l.b16 %v786
        %v796 = vunpack.c.l.b16 %v787
        %v797 = vpack.c.b16 %v794, %v793
        %v798 = vpack.c.b16 %v796, %v795
        %v802 = vsel %vm702, %v788, 0
        %804 = vmatprep.subr.bf16.mxu0 0
        %805 = vmatpush1.bf16.msra.mxu0 %v797
        %806 = vmatprep.subr.bf16.mxu0 0
        %807 = vmatpush1.bf16.msra.mxu0 %v798
        %808 = vmatprep.subr.bf16.mxu0 0
        %809 = vmatpush1.bf16.msra.mxu0 0
        %810 = vmatprep.subr.bf16.mxu0 0
        %811 = vmatpush1.bf16.msra.mxu0 0
        %812 = vmatprep.subr.bf16.mxu0 0
        %813 = vmatpush1.bf16.msra.mxu0 0
        %814 = vmatprep.subr.bf16.mxu0 0
        %815 = vmatpush1.bf16.msra.mxu0 0
        %816 = vmatprep.subr.bf16.mxu0 0
        %817 = vmatpush1.bf16.msra.mxu0 0
        %818 = vmatprep.subr.bf16.mxu0 0
        %819 = vmatpush1.bf16.msra.mxu0 0
        %820 = vmatprep.subr.bf16.mxu0 0
        %821 = vmatpush1.bf16.msra.mxu0 0
        %822 = vmatprep.subr.bf16.mxu0 0
        %823 = vmatpush1.bf16.msra.mxu0 0
        %824 = vmatprep.subr.bf16.mxu0 0
        %825 = vmatpush1.bf16.msra.mxu0 0
        %826 = vmatprep.subr.bf16.mxu0 0
        %827 = vmatpush1.bf16.msra.mxu0 0
        %828 = vmatprep.subr.bf16.mxu0 0
        %829 = vmatpush1.bf16.msra.mxu0 0
        %830 = vmatprep.subr.bf16.mxu0 0
        %831 = vmatpush1.bf16.msra.mxu0 0
        %832 = vmatprep.subr.bf16.mxu0 0
        %833 = vmatpush1.bf16.msra.mxu0 0
        %834 = vmatprep.subr.bf16.mxu0 0
        %835 = vmatpush1.bf16.msra.mxu0 0
        %836 = vmatprep.mubr.bf16.mxu0 0
        %837 = vmatmul.mubr.bf16.gmra.mrb[0].mxu0 %v802
        %v838 = vpop.f32.mrb[0].mxu0
        %v839 = vadd.f32 0.0, %v838
        %v840 = vpop.f32.mrb[0].mxu0
        %v841 = vpop.f32.mrb[0].mxu0
        %v842 = vpop.f32.mrb[0].mxu0
        %843 = vdwg.mxu0
        %v844 = vsub.f32 %v783, %v839
        %v845 = vmul.f32 %v844, %v844
        %v846 = vpack.c.bf16 %v845, %v845
        %v848 = vsel %vm702, %v846, 0
        %850 = vmatprep.subr.bf16.mxu0 0
        %851 = vmatpush1.bf16.msra.mxu0 %v797
        %852 = vmatprep.subr.bf16.mxu0 0
        %853 = vmatpush1.bf16.msra.mxu0 %v798
        %854 = vmatprep.subr.bf16.mxu0 0
        %855 = vmatpush1.bf16.msra.mxu0 0
        %856 = vmatprep.subr.bf16.mxu0 0
        %857 = vmatpush1.bf16.msra.mxu0 0
        %858 = vmatprep.subr.bf16.mxu0 0
        %859 = vmatpush1.bf16.msra.mxu0 0
        %860 = vmatprep.subr.bf16.mxu0 0
        %861 = vmatpush1.bf16.msra.mxu0 0
        %862 = vmatprep.subr.bf16.mxu0 0
        %863 = vmatpush1.bf16.msra.mxu0 0
        %864 = vmatprep.subr.bf16.mxu0 0
        %865 = vmatpush1.bf16.msra.mxu0 0
        %866 = vmatprep.subr.bf16.mxu0 0
        %867 = vmatpush1.bf16.msra.mxu0 0
        %868 = vmatprep.subr.bf16.mxu0 0
        %869 = vmatpush1.bf16.msra.mxu0 0
        %870 = vmatprep.subr.bf16.mxu0 0
        %871 = vmatpush1.bf16.msra.mxu0 0
        %872 = vmatprep.subr.bf16.mxu0 0
        %873 = vmatpush1.bf16.msra.mxu0 0
        %874 = vmatprep.subr.bf16.mxu0 0
        %875 = vmatpush1.bf16.msra.mxu0 0
        %876 = vmatprep.subr.bf16.mxu0 0
        %877 = vmatpush1.bf16.msra.mxu0 0
        %878 = vmatprep.subr.bf16.mxu0 0
        %879 = vmatpush1.bf16.msra.mxu0 0
        %880 = vmatprep.subr.bf16.mxu0 0
        %881 = vmatpush1.bf16.msra.mxu0 0
        %882 = vmatprep.mubr.bf16.mxu0 0
        %883 = vmatmul.mubr.bf16.gmra.mrb[0].mxu0 %v848
        %v884 = vpop.f32.mrb[0].mxu0
        %v885 = vadd.f32 0.0, %v884
        %v886 = vpop.f32.mrb[0].mxu0
        %v887 = vpop.f32.mrb[0].mxu0
        %v888 = vpop.f32.mrb[0].mxu0
        %889 = vdwg.mxu0
        %v890 = vmax.f32 %v885, 0.0
        %v891 = vadd.f32 %v890, 1e-05
        %v892 = vrsqrt.pop %v891
        %v893 = vmul.f32 %v844, %v892
        %v894 = vlaneseq
        %v895 = vshrl.u32 %v894, 7
        %v896 = vsub.s32 0, %v895
        %v897 = vrot.slane %v671, %v896
        %v898 = vmul.f32 %v893, %v897
        %v899 = vlaneseq
        %v900 = vshrl.u32 %v899, 7
        %v901 = vsub.s32 0, %v900
        %v902 = vrot.slane %v672, %v901
        %v903 = vadd.f32 %v898, %v902
        %v904 = vld [vmem:[%s584] sm:$0xf]
        %v906 = vsel %vm702, %v904, 0
        %908 = vmatprep.subr.bf16.mxu0 0
        %909 = vmatpush1.bf16.msra.mxu0 %v729
        %910 = vmatprep.subr.bf16.mxu0 0
        %911 = vmatpush1.bf16.msra.mxu0 %v730
        %912 = vmatprep.subr.bf16.mxu0 0
        %913 = vmatpush1.bf16.msra.mxu0 0
        %914 = vmatprep.subr.bf16.mxu0 0
        %915 = vmatpush1.bf16.msra.mxu0 0
        %916 = vmatprep.subr.bf16.mxu0 0
        %917 = vmatpush1.bf16.msra.mxu0 0
        %918 = vmatprep.subr.bf16.mxu0 0
        %919 = vmatpush1.bf16.msra.mxu0 0
        %920 = vmatprep.subr.bf16.mxu0 0
        %921 = vmatpush1.bf16.msra.mxu0 0
        %922 = vmatprep.subr.bf16.mxu0 0
        %923 = vmatpush1.bf16.msra.mxu0 0
        %924 = vmatprep.subr.bf16.mxu0 0
        %925 = vmatpush1.bf16.msra.mxu0 0
        %926 = vmatprep.subr.bf16.mxu0 0
        %927 = vmatpush1.bf16.msra.mxu0 0
        %928 = vmatprep.subr.bf16.mxu0 0
        %929 = vmatpush1.bf16.msra.mxu0 0
        %930 = vmatprep.subr.bf16.mxu0 0
        %931 = vmatpush1.bf16.msra.mxu0 0
        %932 = vmatprep.subr.bf16.mxu0 0
        %933 = vmatpush1.bf16.msra.mxu0 0
        %934 = vmatprep.subr.bf16.mxu0 0
        %935 = vmatpush1.bf16.msra.mxu0 0
        %936 = vmatprep.subr.bf16.mxu0 0
        %937 = vmatpush1.bf16.msra.mxu0 0
        %938 = vmatprep.subr.bf16.mxu0 0
        %939 = vmatpush1.bf16.msra.mxu0 0
        %940 = vmatprep.mubr.bf16.mxu0 0
        %941 = vmatmul.mubr.bf16.gmra.mrb[0].mxu0 %v906
        %v942 = vpop.f32.mrb[0].mxu0
        %v943 = vadd.f32 %v720, %v942
        %v944 = vpop.f32.mrb[0].mxu0
        %v945 = vpop.f32.mrb[0].mxu0
        %v946 = vpop.f32.mrb[0].mxu0
        %947 = vdwg.mxu0
        %vm948 = vcmp.gt.f32.partialorder %v943, 0.0
        %v949 = vmin.f32 %v943, 0.0
        %v950 = vmul.f32 %v949, 0.7692308
        %v951 = vmul.f32 %v950, 1.442695
        %v952 = vpow.pop %v951
        %v953 = vsub.f32 %v952, 1.0
        %v954 = vmul.f32 %v953, 1.3
        %v955 = vsel %vm948, %v943, %v954
        %v956 = vpack.c.bf16 %v955, %v955
        %v958 = vsel %vm702, %v956, 0
        %960 = vmatprep.subr.bf16.mxu0 0
        %961 = vmatpush1.bf16.msra.mxu0 %v797
        %962 = vmatprep.subr.bf16.mxu0 0
        %963 = vmatpush1.bf16.msra.mxu0 %v798
        %964 = vmatprep.subr.bf16.mxu0 0
        %965 = vmatpush1.bf16.msra.mxu0 0
        %966 = vmatprep.subr.bf16.mxu0 0
        %967 = vmatpush1.bf16.msra.mxu0 0
        %968 = vmatprep.subr.bf16.mxu0 0
        %969 = vmatpush1.bf16.msra.mxu0 0
        %970 = vmatprep.subr.bf16.mxu0 0
        %971 = vmatpush1.bf16.msra.mxu0 0
        %972 = vmatprep.subr.bf16.mxu0 0
        %973 = vmatpush1.bf16.msra.mxu0 0
        %974 = vmatprep.subr.bf16.mxu0 0
        %975 = vmatpush1.bf16.msra.mxu0 0
        %976 = vmatprep.subr.bf16.mxu0 0
        %977 = vmatpush1.bf16.msra.mxu0 0
        %978 = vmatprep.subr.bf16.mxu0 0
        %979 = vmatpush1.bf16.msra.mxu0 0
        %980 = vmatprep.subr.bf16.mxu0 0
        %981 = vmatpush1.bf16.msra.mxu0 0
        %982 = vmatprep.subr.bf16.mxu0 0
        %983 = vmatpush1.bf16.msra.mxu0 0
        %984 = vmatprep.subr.bf16.mxu0 0
        %985 = vmatpush1.bf16.msra.mxu0 0
        %986 = vmatprep.subr.bf16.mxu0 0
        %987 = vmatpush1.bf16.msra.mxu0 0
        %988 = vmatprep.subr.bf16.mxu0 0
        %989 = vmatpush1.bf16.msra.mxu0 0
        %990 = vmatprep.subr.bf16.mxu0 0
        %991 = vmatpush1.bf16.msra.mxu0 0
        %992 = vmatprep.mubr.bf16.mxu0 0
        %993 = vmatmul.mubr.bf16.gmra.mrb[0].mxu0 %v958
        %v994 = vpop.f32.mrb[0].mxu0
        %v995 = vadd.f32 0.0, %v994
        %v996 = vpop.f32.mrb[0].mxu0
        %v997 = vpop.f32.mrb[0].mxu0
        %v998 = vpop.f32.mrb[0].mxu0
        %999 = vdwg.mxu0
        %v1000 = vsub.f32 %v955, %v995
        %v1001 = vmul.f32 %v1000, %v1000
        %v1002 = vpack.c.bf16 %v1001, %v1001
        %v1004 = vsel %vm702, %v1002, 0
        %1006 = vmatprep.subr.bf16.mxu0 0
        %1007 = vmatpush1.bf16.msra.mxu0 %v797
        %1008 = vmatprep.subr.bf16.mxu0 0
        %1009 = vmatpush1.bf16.msra.mxu0 %v798
        %1010 = vmatprep.subr.bf16.mxu0 0
        %1011 = vmatpush1.bf16.msra.mxu0 0
        %1012 = vmatprep.subr.bf16.mxu0 0
        %1013 = vmatpush1.bf16.msra.mxu0 0
        %1014 = vmatprep.subr.bf16.mxu0 0
        %1015 = vmatpush1.bf16.msra.mxu0 0
        %1016 = vmatprep.subr.bf16.mxu0 0
        %1017 = vmatpush1.bf16.msra.mxu0 0
        %1018 = vmatprep.subr.bf16.mxu0 0
        %1019 = vmatpush1.bf16.msra.mxu0 0
        %1020 = vmatprep.subr.bf16.mxu0 0
        %1021 = vmatpush1.bf16.msra.mxu0 0
        %1022 = vmatprep.subr.bf16.mxu0 0
        %1023 = vmatpush1.bf16.msra.mxu0 0
        %1024 = vmatprep.subr.bf16.mxu0 0
        %1025 = vmatpush1.bf16.msra.mxu0 0
        %1026 = vmatprep.subr.bf16.mxu0 0
        %1027 = vmatpush1.bf16.msra.mxu0 0
        %1028 = vmatprep.subr.bf16.mxu0 0
        %1029 = vmatpush1.bf16.msra.mxu0 0
        %1030 = vmatprep.subr.bf16.mxu0 0
        %1031 = vmatpush1.bf16.msra.mxu0 0
        %1032 = vmatprep.subr.bf16.mxu0 0
        %1033 = vmatpush1.bf16.msra.mxu0 0
        %1034 = vmatprep.subr.bf16.mxu0 0
        %1035 = vmatpush1.bf16.msra.mxu0 0
        %1036 = vmatprep.subr.bf16.mxu0 0
        %1037 = vmatpush1.bf16.msra.mxu0 0
        %1038 = vmatprep.mubr.bf16.mxu0 0
        %1039 = vmatmul.mubr.bf16.gmra.mrb[0].mxu0 %v1004
        %v1040 = vpop.f32.mrb[0].mxu0
        %v1041 = vadd.f32 0.0, %v1040
        %v1042 = vpop.f32.mrb[0].mxu0
        %v1043 = vpop.f32.mrb[0].mxu0
        %v1044 = vpop.f32.mrb[0].mxu0
        %1045 = vdwg.mxu0
        %v1046 = vmax.f32 %v1041, 0.0
        %v1047 = vadd.f32 %v1046, 1e-05
        %v1048 = vrsqrt.pop %v1047
        %v1049 = vmul.f32 %v1000, %v1048
        %v1050 = vmul.f32 %v1049, %v897
        %v1051 = vadd.f32 %v1050, %v902
        %v1052 = vpack.c.bf16 %v715, %v715
        %v1054 = vsel %vm702, %v1052, 0
        %1056 = vmatprep.subr.bf16.mxu0 0
        %1057 = vmatpush1.bf16.msra.mxu0 %v729
        %1058 = vmatprep.subr.bf16.mxu0 0
        %1059 = vmatpush1.bf16.msra.mxu0 %v730
        %1060 = vmatprep.subr.bf16.mxu0 0
        %1061 = vmatpush1.bf16.msra.mxu0 0
        %1062 = vmatprep.subr.bf16.mxu0 0
        %1063 = vmatpush1.bf16.msra.mxu0 0
        %1064 = vmatprep.subr.bf16.mxu0 0
        %1065 = vmatpush1.bf16.msra.mxu0 0
        %1066 = vmatprep.subr.bf16.mxu0 0
        %1067 = vmatpush1.bf16.msra.mxu0 0
        %1068 = vmatprep.subr.bf16.mxu0 0
        %1069 = vmatpush1.bf16.msra.mxu0 0
        %1070 = vmatprep.subr.bf16.mxu0 0
        %1071 = vmatpush1.bf16.msra.mxu0 0
        %1072 = vmatprep.subr.bf16.mxu0 0
        %1073 = vmatpush1.bf16.msra.mxu0 0
        %1074 = vmatprep.subr.bf16.mxu0 0
        %1075 = vmatpush1.bf16.msra.mxu0 0
        %1076 = vmatprep.subr.bf16.mxu0 0
        %1077 = vmatpush1.bf16.msra.mxu0 0
        %1078 = vmatprep.subr.bf16.mxu0 0
        %1079 = vmatpush1.bf16.msra.mxu0 0
        %1080 = vmatprep.subr.bf16.mxu0 0
        %1081 = vmatpush1.bf16.msra.mxu0 0
        %1082 = vmatprep.subr.bf16.mxu0 0
        %1083 = vmatpush1.bf16.msra.mxu0 0
        %1084 = vmatprep.subr.bf16.mxu0 0
        %1085 = vmatpush1.bf16.msra.mxu0 0
        %1086 = vmatprep.subr.bf16.mxu0 0
        %1087 = vmatpush1.bf16.msra.mxu0 0
        %1088 = vmatprep.mubr.bf16.mxu0 0
        %1089 = vmatmul.mubr.bf16.gmra.mrb[0].mxu0 %v1054
        %v1090 = vpop.f32.mrb[0].mxu0
        %v1091 = vadd.f32 %v670, %v1090
        %v1092 = vpop.f32.mrb[0].mxu0
        %v1093 = vpop.f32.mrb[0].mxu0
        %v1094 = vpop.f32.mrb[0].mxu0
        %1095 = vdwg.mxu0
        %vm1096 = vcmp.gt.f32.partialorder %v1091, 0.0
        %v1097 = vmin.f32 %v1091, 0.0
        %v1098 = vmul.f32 %v1097, 0.7692308
        %v1099 = vmul.f32 %v1098, 1.442695
        %v1100 = vpow.pop %v1099
        %v1101 = vsub.f32 %v1100, 1.0
        %v1102 = vmul.f32 %v1101, 1.3
        %v1103 = vsel %vm1096, %v1091, %v1102
        %v1104 = vpack.c.bf16 %v1103, %v1103
        %v1106 = vsel %vm702, %v1104, 0
        %1108 = vmatprep.subr.bf16.mxu0 0
        %1109 = vmatpush1.bf16.msra.mxu0 %v797
        %1110 = vmatprep.subr.bf16.mxu0 0
        %1111 = vmatpush1.bf16.msra.mxu0 %v798
        %1112 = vmatprep.subr.bf16.mxu0 0
        %1113 = vmatpush1.bf16.msra.mxu0 0
        %1114 = vmatprep.subr.bf16.mxu0 0
        %1115 = vmatpush1.bf16.msra.mxu0 0
        %1116 = vmatprep.subr.bf16.mxu0 0
        %1117 = vmatpush1.bf16.msra.mxu0 0
        %1118 = vmatprep.subr.bf16.mxu0 0
        %1119 = vmatpush1.bf16.msra.mxu0 0
        %1120 = vmatprep.subr.bf16.mxu0 0
        %1121 = vmatpush1.bf16.msra.mxu0 0
        %1122 = vmatprep.subr.bf16.mxu0 0
        %1123 = vmatpush1.bf16.msra.mxu0 0
        %1124 = vmatprep.subr.bf16.mxu0 0
        %1125 = vmatpush1.bf16.msra.mxu0 0
        %1126 = vmatprep.subr.bf16.mxu0 0
        %1127 = vmatpush1.bf16.msra.mxu0 0
        %1128 = vmatprep.subr.bf16.mxu0 0
        %1129 = vmatpush1.bf16.msra.mxu0 0
        %1130 = vmatprep.subr.bf16.mxu0 0
        %1131 = vmatpush1.bf16.msra.mxu0 0
        %1132 = vmatprep.subr.bf16.mxu0 0
        %1133 = vmatpush1.bf16.msra.mxu0 0
        %1134 = vmatprep.subr.bf16.mxu0 0
        %1135 = vmatpush1.bf16.msra.mxu0 0
        %1136 = vmatprep.subr.bf16.mxu0 0
        %1137 = vmatpush1.bf16.msra.mxu0 0
        %1138 = vmatprep.subr.bf16.mxu0 0
        %1139 = vmatpush1.bf16.msra.mxu0 0
        %1140 = vmatprep.mubr.bf16.mxu0 0
        %1141 = vmatmul.mubr.bf16.gmra.mrb[0].mxu0 %v1106
        %v1142 = vpop.f32.mrb[0].mxu0
        %v1143 = vadd.f32 0.0, %v1142
        %v1144 = vpop.f32.mrb[0].mxu0
        %v1145 = vpop.f32.mrb[0].mxu0
        %v1146 = vpop.f32.mrb[0].mxu0
        %1147 = vdwg.mxu0
        %v1148 = vsub.f32 %v1103, %v1143
        %v1149 = vmul.f32 %v1148, %v1148
        %v1150 = vpack.c.bf16 %v1149, %v1149
        %v1152 = vsel %vm702, %v1150, 0
        %1154 = vmatprep.subr.bf16.mxu0 0
        %1155 = vmatpush1.bf16.msra.mxu0 %v797
        %1156 = vmatprep.subr.bf16.mxu0 0
        %1157 = vmatpush1.bf16.msra.mxu0 %v798
        %1158 = vmatprep.subr.bf16.mxu0 0
        %1159 = vmatpush1.bf16.msra.mxu0 0
        %1160 = vmatprep.subr.bf16.mxu0 0
        %1161 = vmatpush1.bf16.msra.mxu0 0
        %1162 = vmatprep.subr.bf16.mxu0 0
        %1163 = vmatpush1.bf16.msra.mxu0 0
        %1164 = vmatprep.subr.bf16.mxu0 0
        %1165 = vmatpush1.bf16.msra.mxu0 0
        %1166 = vmatprep.subr.bf16.mxu0 0
        %1167 = vmatpush1.bf16.msra.mxu0 0
        %1168 = vmatprep.subr.bf16.mxu0 0
        %1169 = vmatpush1.bf16.msra.mxu0 0
        %1170 = vmatprep.subr.bf16.mxu0 0
        %1171 = vmatpush1.bf16.msra.mxu0 0
        %1172 = vmatprep.subr.bf16.mxu0 0
        %1173 = vmatpush1.bf16.msra.mxu0 0
        %1174 = vmatprep.subr.bf16.mxu0 0
        %1175 = vmatpush1.bf16.msra.mxu0 0
        %1176 = vmatprep.subr.bf16.mxu0 0
        %1177 = vmatpush1.bf16.msra.mxu0 0
        %1178 = vmatprep.subr.bf16.mxu0 0
        %1179 = vmatpush1.bf16.msra.mxu0 0
        %1180 = vmatprep.subr.bf16.mxu0 0
        %1181 = vmatpush1.bf16.msra.mxu0 0
        %1182 = vmatprep.subr.bf16.mxu0 0
        %1183 = vmatpush1.bf16.msra.mxu0 0
        %1184 = vmatprep.subr.bf16.mxu0 0
        %1185 = vmatpush1.bf16.msra.mxu0 0
        %1186 = vmatprep.mubr.bf16.mxu0 0
        %1187 = vmatmul.mubr.bf16.gmra.mrb[0].mxu0 %v1152
        %v1188 = vpop.f32.mrb[0].mxu0
        %v1189 = vadd.f32 0.0, %v1188
        %v1190 = vpop.f32.mrb[0].mxu0
        %v1191 = vpop.f32.mrb[0].mxu0
        %v1192 = vpop.f32.mrb[0].mxu0
        %1193 = vdwg.mxu0
        %v1194 = vmax.f32 %v1189, 0.0
        %v1195 = vadd.f32 %v1194, 1e-05
        %v1196 = vrsqrt.pop %v1195
        %v1197 = vmul.f32 %v1148, %v1196
        %v1198 = vmul.f32 %v1197, %v671
        %v1199 = vadd.f32 %v1198, %v672
        %v1200 = vlaneseq
        %v1201 = vshrl.u32 %v1200, 7
        %v1202 = vsub.s32 0, %v1201
        %v1203 = vrot.slane %v1199, %v1202
        %v1204 = vmul.f32 %v1203, %v903
        %v1205 = vpack.c.bf16 %v1204, %v1204
        %v1206 = vld [vmem:[%s5] sm:$0xf]
        %v1207 = vld [vmem:[%s5 + $0x4] sm:$0xf]
        %v1208 = vld [vmem:[%s5 + $0x8] sm:$0xf]
        %v1209 = vld [vmem:[%s5 + $0xc] sm:$0xf]
        %v1210 = vld [vmem:[#allocation8] sm:$0x1]
        %v1212 = vlaneseq
        %v1213 = vshrl.u32 %v1212, 7
        %v1214 = vsub.s32 0, %v1213
        %v1215 = vrot.slane %v1210, %v1214
        %v1221 = vunpack.c.l.b16 %v1206
        %v1222 = vunpack.c.l.b16 %v1207
        %v1223 = vunpack.c.l.b16 %v1208
        %v1224 = vunpack.c.l.b16 %v1209
        %v1225 = vpack.c.b16 %v1222, %v1221
        %v1226 = vpack.c.b16 %v1224, %v1223
        %v1230 = vsel %vm702, %v1205, 0
        %1232 = vmatprep.subr.bf16.mxu0 0
        %1233 = vmatpush1.bf16.msra.mxu0 %v1225
        %1234 = vmatprep.subr.bf16.mxu0 0
        %1235 = vmatpush1.bf16.msra.mxu0 %v1226
        %1236 = vmatprep.subr.bf16.mxu0 0
        %1237 = vmatpush1.bf16.msra.mxu0 0
        %1238 = vmatprep.subr.bf16.mxu0 0
        %1239 = vmatpush1.bf16.msra.mxu0 0
        %1240 = vmatprep.subr.bf16.mxu0 0
        %1241 = vmatpush1.bf16.msra.mxu0 0
        %1242 = vmatprep.subr.bf16.mxu0 0
        %1243 = vmatpush1.bf16.msra.mxu0 0
        %1244 = vmatprep.subr.bf16.mxu0 0
        %1245 = vmatpush1.bf16.msra.mxu0 0
        %1246 = vmatprep.subr.bf16.mxu0 0
        %1247 = vmatpush1.bf16.msra.mxu0 0
        %1248 = vmatprep.subr.bf16.mxu0 0
        %1249 = vmatpush1.bf16.msra.mxu0 0
        %1250 = vmatprep.subr.bf16.mxu0 0
        %1251 = vmatpush1.bf16.msra.mxu0 0
        %1252 = vmatprep.subr.bf16.mxu0 0
        %1253 = vmatpush1.bf16.msra.mxu0 0
        %1254 = vmatprep.subr.bf16.mxu0 0
        %1255 = vmatpush1.bf16.msra.mxu0 0
        %1256 = vmatprep.subr.bf16.mxu0 0
        %1257 = vmatpush1.bf16.msra.mxu0 0
        %1258 = vmatprep.subr.bf16.mxu0 0
        %1259 = vmatpush1.bf16.msra.mxu0 0
        %1260 = vmatprep.subr.bf16.mxu0 0
        %1261 = vmatpush1.bf16.msra.mxu0 0
        %1262 = vmatprep.subr.bf16.mxu0 0
        %1263 = vmatpush1.bf16.msra.mxu0 0
        %1264 = vmatprep.mubr.bf16.mxu0 0
        %1265 = vmatmul.mubr.bf16.gmra.mrb[0].mxu0 %v1230
        %v1266 = vpop.f32.mrb[0].mxu0
        %v1267 = vadd.f32 %v1215, %v1266
        %v1268 = vpop.f32.mrb[0].mxu0
        %v1269 = vpop.f32.mrb[0].mxu0
        %v1270 = vpop.f32.mrb[0].mxu0
        %1271 = vdwg.mxu0
        %v1272 = vmax.f32 %v1267, 0.0
        %v1273 = vmul.f32 %v1272, %v699
        %vm1274 = vcmask 130048
        %v1275 = vsel %vm1274, %v1273, 0.0
        %v1276 = vrot.slane %v1275, 4
        %v1277 = vadd.f32 %v1275, %v1276
        %v1278 = vrot.slane %v1277, 2
        %v1279 = vadd.f32 %v1277, %v1278
        %v1280 = vrot.slane %v1279, 1
        %v1281 = vadd.f32 %v1279, %v1280
        %v1282 = vmul.f32 %v1281, %v713
        %v1283 = vpack.c.bf16 %v1272, %v1272
        %v1284 = vld [vmem:[#allocation10] sm:$0xf]
        %v1285 = vld [vmem:[#allocation10 + $0x4] sm:$0xf]
        %v1288 = vunpack.c.l.b16 %v1284
        %v1289 = vunpack.c.l.b16 %v1285
        %v1290 = vpack.c.b16 %v1289, %v1288
        %v1293 = vsel %vm1274, %v1283, 0
        %1295 = vmatprep.subr.bf16.mxu0 0
        %1296 = vmatpush1.bf16.msra.mxu0 %v1290
        %1297 = vmatprep.subr.bf16.mxu0 0
        %1298 = vmatpush1.bf16.msra.mxu0 0
        %1299 = vmatprep.subr.bf16.mxu0 0
        %1300 = vmatpush1.bf16.msra.mxu0 0
        %1301 = vmatprep.subr.bf16.mxu0 0
        %1302 = vmatpush1.bf16.msra.mxu0 0
        %1303 = vmatprep.subr.bf16.mxu0 0
        %1304 = vmatpush1.bf16.msra.mxu0 0
        %1305 = vmatprep.subr.bf16.mxu0 0
        %1306 = vmatpush1.bf16.msra.mxu0 0
        %1307 = vmatprep.subr.bf16.mxu0 0
        %1308 = vmatpush1.bf16.msra.mxu0 0
        %1309 = vmatprep.subr.bf16.mxu0 0
        %1310 = vmatpush1.bf16.msra.mxu0 0
        %1311 = vmatprep.subr.bf16.mxu0 0
        %1312 = vmatpush1.bf16.msra.mxu0 0
        %1313 = vmatprep.subr.bf16.mxu0 0
        %1314 = vmatpush1.bf16.msra.mxu0 0
        %1315 = vmatprep.subr.bf16.mxu0 0
        %1316 = vmatpush1.bf16.msra.mxu0 0
        %1317 = vmatprep.subr.bf16.mxu0 0
        %1318 = vmatpush1.bf16.msra.mxu0 0
        %1319 = vmatprep.subr.bf16.mxu0 0
        %1320 = vmatpush1.bf16.msra.mxu0 0
        %1321 = vmatprep.subr.bf16.mxu0 0
        %1322 = vmatpush1.bf16.msra.mxu0 0
        %1323 = vmatprep.subr.bf16.mxu0 0
        %1324 = vmatpush1.bf16.msra.mxu0 0
        %1325 = vmatprep.subr.bf16.mxu0 0
        %1326 = vmatpush1.bf16.msra.mxu0 0
        %1327 = vmatprep.mubr.bf16.mxu0 0
        %1328 = vmatmul.mubr.bf16.gmra.mrb[0].mxu0 %v1293
        %v1329 = vpop.f32.mrb[0].mxu0
        %v1330 = vadd.f32 0.0, %v1329
        %v1331 = vpop.f32.mrb[0].mxu0
        %v1332 = vpop.f32.mrb[0].mxu0
        %v1333 = vpop.f32.mrb[0].mxu0
        %1334 = vdwg.mxu0
        %v1335 = vsel %vm702, %v1330, -inf
        %v1336 = vrot.slane %v1335, 4
        %v1337 = vmax.f32 %v1335, %v1336
        %v1338 = vrot.slane %v1337, 2
        %v1339 = vmax.f32 %v1337, %v1338
        %v1340 = vrot.slane %v1339, 1
        %v1341 = vmax.f32 %v1339, %v1340
        %v1342 = vsub.f32 %v1330, %v1341
        %v1343 = vmul.f32 %v1342, 1.442695
        %v1344 = vpow.pop %v1343
        %v1345 = vmul.f32 %v1344, %v699
        %v1346 = vsel %vm702, %v1345, 0.0
        %v1347 = vrot.slane %v1346, 4
        %v1348 = vadd.f32 %v1346, %v1347
        %v1349 = vrot.slane %v1348, 2
        %v1350 = vadd.f32 %v1348, %v1349
        %v1351 = vrot.slane %v1350, 1
        %v1352 = vadd.f32 %v1350, %v1351
        %v1353 = vmax.f32 %v1352, 1e-30
        %v1354 = vrcp.pop %v1353
        %v1355 = vmul.f32 %v1345, %v1354
        %v1356 = vmul.f32 %v1355, %v1051
        %v1357 = vsel %vm702, %v1356, 0.0
        %v1358 = vrot.slane %v1357, 4
        %v1359 = vadd.f32 %v1357, %v1358
        %v1360 = vrot.slane %v1359, 2
        %v1361 = vadd.f32 %v1359, %v1360
        %v1362 = vrot.slane %v1361, 1
        %v1363 = vadd.f32 %v1361, %v1362
        %v1364 = vpack.c.bf16 %v1282, %v1282
        %v1365 = vld [vmem:[#allocation11] sm:$0xf]
        %v1366 = vld [vmem:[#allocation11 + $0x4] sm:$0xf]
        %v1369 = vunpack.c.l.b16 %v1365
        %v1370 = vunpack.c.l.b16 %v1366
        %v1371 = vpack.c.b16 %v1370, %v1369
        %v1374 = vsel %vm1274, %v1364, 0
        %1376 = vmatprep.subr.bf16.mxu0 0
        %1377 = vmatpush1.bf16.msra.mxu0 %v1371
        %1378 = vmatprep.subr.bf16.mxu0 0
        %1379 = vmatpush1.bf16.msra.mxu0 0
        %1380 = vmatprep.subr.bf16.mxu0 0
        %1381 = vmatpush1.bf16.msra.mxu0 0
        %1382 = vmatprep.subr.bf16.mxu0 0
        %1383 = vmatpush1.bf16.msra.mxu0 0
        %1384 = vmatprep.subr.bf16.mxu0 0
        %1385 = vmatpush1.bf16.msra.mxu0 0
        %1386 = vmatprep.subr.bf16.mxu0 0
        %1387 = vmatpush1.bf16.msra.mxu0 0
        %1388 = vmatprep.subr.bf16.mxu0 0
        %1389 = vmatpush1.bf16.msra.mxu0 0
        %1390 = vmatprep.subr.bf16.mxu0 0
        %1391 = vmatpush1.bf16.msra.mxu0 0
        %1392 = vmatprep.subr.bf16.mxu0 0
        %1393 = vmatpush1.bf16.msra.mxu0 0
        %1394 = vmatprep.subr.bf16.mxu0 0
        %1395 = vmatpush1.bf16.msra.mxu0 0
        %1396 = vmatprep.subr.bf16.mxu0 0
        %1397 = vmatpush1.bf16.msra.mxu0 0
        %1398 = vmatprep.subr.bf16.mxu0 0
        %1399 = vmatpush1.bf16.msra.mxu0 0
        %1400 = vmatprep.subr.bf16.mxu0 0
        %1401 = vmatpush1.bf16.msra.mxu0 0
        %1402 = vmatprep.subr.bf16.mxu0 0
        %1403 = vmatpush1.bf16.msra.mxu0 0
        %1404 = vmatprep.subr.bf16.mxu0 0
        %1405 = vmatpush1.bf16.msra.mxu0 0
        %1406 = vmatprep.subr.bf16.mxu0 0
        %1407 = vmatpush1.bf16.msra.mxu0 0
        %1408 = vmatprep.mubr.bf16.mxu0 0
        %1409 = vmatmul.mubr.bf16.gmra.mrb[0].mxu0 %v1374
        %v1410 = vpop.f32.mrb[0].mxu0
        %v1411 = vadd.f32 %v673, %v1410
        %v1412 = vpop.f32.mrb[0].mxu0
        %v1413 = vpop.f32.mrb[0].mxu0
        %v1414 = vpop.f32.mrb[0].mxu0
        %1415 = vdwg.mxu0
        %v1416 = vxor.u32 %v1411, 2147483648
        %v1417 = vmul.f32 %v1416, 1.442695
        %v1418 = vpow.pop %v1417
        %v1419 = vadd.f32 %v1418, 1.0
        %v1420 = vrcp.pop %v1419
        %v1421 = vmul.f32 1.0, %v1420
        %v1422 = vmul.f32 %v1199, %v1363
        %v1423 = vmul.f32 %v1422, %v1421
        %v1424 = vpack.c.bf16 %v1423, %v1423
        %v1425 = vld [vmem:[%s9] sm:$0xf]
        %v1426 = vld [vmem:[%s9 + $0x4] sm:$0xf]
        %v1427 = vld [vmem:[%s9 + $0x8] sm:$0xf]
        %v1428 = vld [vmem:[%s9 + $0xc] sm:$0xf]
        %v1433 = vunpack.c.l.b16 %v1425
        %v1434 = vunpack.c.l.b16 %v1426
        %v1435 = vunpack.c.l.b16 %v1427
        %v1436 = vunpack.c.l.b16 %v1428
        %v1437 = vpack.c.b16 %v1434, %v1433
        %v1438 = vpack.c.b16 %v1436, %v1435
        %v1442 = vsel %vm702, %v1424, 0
        %1444 = vmatprep.subr.bf16.mxu0 0
        %1445 = vmatpush1.bf16.msra.mxu0 %v1437
        %1446 = vmatprep.subr.bf16.mxu0 0
        %1447 = vmatpush1.bf16.msra.mxu0 %v1438
        %1448 = vmatprep.subr.bf16.mxu0 0
        %1449 = vmatpush1.bf16.msra.mxu0 0
        %1450 = vmatprep.subr.bf16.mxu0 0
        %1451 = vmatpush1.bf16.msra.mxu0 0
        %1452 = vmatprep.subr.bf16.mxu0 0
        %1453 = vmatpush1.bf16.msra.mxu0 0
        %1454 = vmatprep.subr.bf16.mxu0 0
        %1455 = vmatpush1.bf16.msra.mxu0 0
        %1456 = vmatprep.subr.bf16.mxu0 0
        %1457 = vmatpush1.bf16.msra.mxu0 0
        %1458 = vmatprep.subr.bf16.mxu0 0
        %1459 = vmatpush1.bf16.msra.mxu0 0
        %1460 = vmatprep.subr.bf16.mxu0 0
        %1461 = vmatpush1.bf16.msra.mxu0 0
        %1462 = vmatprep.subr.bf16.mxu0 0
        %1463 = vmatpush1.bf16.msra.mxu0 0
        %1464 = vmatprep.subr.bf16.mxu0 0
        %1465 = vmatpush1.bf16.msra.mxu0 0
        %1466 = vmatprep.subr.bf16.mxu0 0
        %1467 = vmatpush1.bf16.msra.mxu0 0
        %1468 = vmatprep.subr.bf16.mxu0 0
        %1469 = vmatpush1.bf16.msra.mxu0 0
        %1470 = vmatprep.subr.bf16.mxu0 0
        %1471 = vmatpush1.bf16.msra.mxu0 0
        %1472 = vmatprep.subr.bf16.mxu0 0
        %1473 = vmatpush1.bf16.msra.mxu0 0
        %1474 = vmatprep.subr.bf16.mxu0 0
        %1475 = vmatpush1.bf16.msra.mxu0 0
        %1476 = vmatprep.mubr.bf16.mxu0 0
        %1477 = vmatmul.mubr.bf16.gmra.mrb[0].mxu0 %v1442
        %v1478 = vpop.f32.mrb[0].mxu0
        %v1479 = vadd.f32 0.0, %v1478
        %v1480 = vpop.f32.mrb[0].mxu0
        %v1481 = vpop.f32.mrb[0].mxu0
        %v1482 = vpop.f32.mrb[0].mxu0
        %1483 = vdwg.mxu0
        %v1484 = vld [vmem:[%s10] sm:$0xf]
        %v1485 = vld [vmem:[%s10 + $0x4] sm:$0xf]
        %v1486 = vld [vmem:[%s10 + $0x8] sm:$0xf]
        %v1487 = vld [vmem:[%s10 + $0xc] sm:$0xf]
        %v1488 = vlaneseq
        %v1489 = vshrl.u32 %v1488, 7
        %v1490 = vsub.s32 0, %v1489
        %v1491 = vrot.slane %v1479, %v1490
        %v1496 = vunpack.c.l.b16 %v1484
        %v1497 = vunpack.c.l.b16 %v1485
        %v1498 = vunpack.c.l.b16 %v1486
        %v1499 = vunpack.c.l.b16 %v1487
        %v1500 = vpack.c.b16 %v1497, %v1496
        %v1501 = vpack.c.b16 %v1499, %v1498
        %v1505 = vsel %vm702, %v679, 0
        %1507 = vmatprep.subr.bf16.mxu0 0
        %1508 = vmatpush1.bf16.msra.mxu0 %v1500
        %1509 = vmatprep.subr.bf16.mxu0 0
        %1510 = vmatpush1.bf16.msra.mxu0 %v1501
        %1511 = vmatprep.subr.bf16.mxu0 0
        %1512 = vmatpush1.bf16.msra.mxu0 0
        %1513 = vmatprep.subr.bf16.mxu0 0
        %1514 = vmatpush1.bf16.msra.mxu0 0
        %1515 = vmatprep.subr.bf16.mxu0 0
        %1516 = vmatpush1.bf16.msra.mxu0 0
        %1517 = vmatprep.subr.bf16.mxu0 0
        %1518 = vmatpush1.bf16.msra.mxu0 0
        %1519 = vmatprep.subr.bf16.mxu0 0
        %1520 = vmatpush1.bf16.msra.mxu0 0
        %1521 = vmatprep.subr.bf16.mxu0 0
        %1522 = vmatpush1.bf16.msra.mxu0 0
        %1523 = vmatprep.subr.bf16.mxu0 0
        %1524 = vmatpush1.bf16.msra.mxu0 0
        %1525 = vmatprep.subr.bf16.mxu0 0
        %1526 = vmatpush1.bf16.msra.mxu0 0
        %1527 = vmatprep.subr.bf16.mxu0 0
        %1528 = vmatpush1.bf16.msra.mxu0 0
        %1529 = vmatprep.subr.bf16.mxu0 0
        %1530 = vmatpush1.bf16.msra.mxu0 0
        %1531 = vmatprep.subr.bf16.mxu0 0
        %1532 = vmatpush1.bf16.msra.mxu0 0
        %1533 = vmatprep.subr.bf16.mxu0 0
        %1534 = vmatpush1.bf16.msra.mxu0 0
        %1535 = vmatprep.subr.bf16.mxu0 0
        %1536 = vmatpush1.bf16.msra.mxu0 0
        %1537 = vmatprep.subr.bf16.mxu0 0
        %1538 = vmatpush1.bf16.msra.mxu0 0
        %1539 = vmatprep.mubr.bf16.mxu0 0
        %1540 = vmatmul.mubr.bf16.gmra.mrb[0].mxu0 %v1505
        %v1541 = vpop.f32.mrb[0].mxu0
        %v1542 = vadd.f32 %v1491, %v1541
        %v1543 = vpop.f32.mrb[0].mxu0
        %v1544 = vpop.f32.mrb[0].mxu0
        %v1545 = vpop.f32.mrb[0].mxu0
        %1546 = vdwg.mxu0
        %v1547 = vlaneseq
        %v1548 = vshrl.u32 %v1547, 7
        %v1549 = vsub.s32 0, %v1548
        %v1550 = vrot.slane %v674, %v1549
        %v1551 = vadd.f32 %v1542, %v1550
        %v1552 = vmax.f32 %v1551, 0.0
        %v1553 = vadd.f32 %v1552, %v681
        %v1554 = vsel %vm702, %v1553, 0.0
        %1555 = vadd.xlane.f32.xlu0 %v1554
        %v1556 = vpop.xlane.xlu0 %1555
        %v1557 = vrcp.pop 32.0
        %v1558 = vmul.f32 %v1556, %v1557
        %v1559 = vmul.f32 %v1553, %v1553
        %v1560 = vsel %vm702, %v1559, 0.0
        %1561 = vadd.xlane.f32.xlu0 %v1560
        %v1562 = vpop.xlane.xlu0 %1561
        %v1563 = vmul.f32 %v1562, %v1557
        %v1564 = vmul.f32 %v1558, %v1558
        %v1565 = vsub.f32 %v1563, %v1564
        %v1566 = vsub.f32 %v1553, %v1558
        %v1567 = vmax.f32 %v1565, 0.0
        %v1568 = vadd.f32 %v1567, 1e-05
        %v1569 = vrsqrt.pop %v1568
        %v1570 = vmul.f32 %v1566, %v1569
        %v1571 = vlaneseq
        %v1572 = vshrl.u32 %v1571, 7
        %v1573 = vsub.s32 0, %v1572
        %v1574 = vrot.slane %v675, %v1573
        %v1575 = vmul.f32 %v1570, %v1574
        %v1576 = vlaneseq
        %v1577 = vshrl.u32 %v1576, 7
        %v1578 = vsub.s32 0, %v1577
        %v1579 = vrot.slane %v676, %v1578
        %v1580 = vadd.f32 %v1575, %v1579
        %v1581 = vpack.c.bf16 %v1580, %v1580
        %v1582 = vld [vmem:[%s11] sm:$0xf]
        %v1583 = vld [vmem:[%s11 + $0x4] sm:$0xf]
        %v1584 = vld [vmem:[%s11 + $0x8] sm:$0xf]
        %v1585 = vld [vmem:[%s11 + $0xc] sm:$0xf]
        %v1586 = vlaneseq
        %v1587 = vshrl.u32 %v1586, 7
        %v1588 = vsub.s32 0, %v1587
        %v1589 = vrot.slane %v677, %v1588
        %v1594 = vunpack.c.l.b16 %v1582
        %v1595 = vunpack.c.l.b16 %v1583
        %v1596 = vunpack.c.l.b16 %v1584
        %v1597 = vunpack.c.l.b16 %v1585
        %v1598 = vpack.c.b16 %v1595, %v1594
        %v1599 = vpack.c.b16 %v1597, %v1596
        %v1603 = vsel %vm702, %v1581, 0
        %1605 = vmatprep.subr.bf16.mxu0 0
        %1606 = vmatpush1.bf16.msra.mxu0 %v1598
        %1607 = vmatprep.subr.bf16.mxu0 0
        %1608 = vmatpush1.bf16.msra.mxu0 %v1599
        %1609 = vmatprep.subr.bf16.mxu0 0
        %1610 = vmatpush1.bf16.msra.mxu0 0
        %1611 = vmatprep.subr.bf16.mxu0 0
        %1612 = vmatpush1.bf16.msra.mxu0 0
        %1613 = vmatprep.subr.bf16.mxu0 0
        %1614 = vmatpush1.bf16.msra.mxu0 0
        %1615 = vmatprep.subr.bf16.mxu0 0
        %1616 = vmatpush1.bf16.msra.mxu0 0
        %1617 = vmatprep.subr.bf16.mxu0 0
        %1618 = vmatpush1.bf16.msra.mxu0 0
        %1619 = vmatprep.subr.bf16.mxu0 0
        %1620 = vmatpush1.bf16.msra.mxu0 0
        %1621 = vmatprep.subr.bf16.mxu0 0
        %1622 = vmatpush1.bf16.msra.mxu0 0
        %1623 = vmatprep.subr.bf16.mxu0 0
        %1624 = vmatpush1.bf16.msra.mxu0 0
        %1625 = vmatprep.subr.bf16.mxu0 0
        %1626 = vmatpush1.bf16.msra.mxu0 0
        %1627 = vmatprep.subr.bf16.mxu0 0
        %1628 = vmatpush1.bf16.msra.mxu0 0
        %1629 = vmatprep.subr.bf16.mxu0 0
        %1630 = vmatpush1.bf16.msra.mxu0 0
        %1631 = vmatprep.subr.bf16.mxu0 0
        %1632 = vmatpush1.bf16.msra.mxu0 0
        %1633 = vmatprep.subr.bf16.mxu0 0
        %1634 = vmatpush1.bf16.msra.mxu0 0
        %1635 = vmatprep.subr.bf16.mxu0 0
        %1636 = vmatpush1.bf16.msra.mxu0 0
        %1637 = vmatprep.mubr.bf16.mxu0 0
        %1638 = vmatmul.mubr.bf16.gmra.mrb[0].mxu0 %v1603
        %v1639 = vpop.f32.mrb[0].mxu0
        %v1640 = vadd.f32 %v1589, %v1639
        %v1641 = vpop.f32.mrb[0].mxu0
        %v1642 = vpop.f32.mrb[0].mxu0
        %v1643 = vpop.f32.mrb[0].mxu0
        %1644 = vdwg.mxu0
        %v1645 = vmax.f32 %v1640, 0.0
        %v1646 = vpack.c.bf16 %v1645, %v1645
        %v1647 = vld [vmem:[%s12] sm:$0xf]
        %v1648 = vld [vmem:[%s12 + $0x4] sm:$0xf]
        %v1649 = vld [vmem:[%s12 + $0x8] sm:$0xf]
        %v1650 = vld [vmem:[%s12 + $0xc] sm:$0xf]
        %v1651 = vlaneseq
        %v1652 = vshrl.u32 %v1651, 7
        %v1653 = vsub.s32 0, %v1652
        %v1654 = vrot.slane %v678, %v1653
        %v1659 = vunpack.c.l.b16 %v1647
        %v1660 = vunpack.c.l.b16 %v1648
        %v1661 = vunpack.c.l.b16 %v1649
        %v1662 = vunpack.c.l.b16 %v1650
        %v1663 = vpack.c.b16 %v1660, %v1659
        %v1664 = vpack.c.b16 %v1662, %v1661
        %v1668 = vsel %vm702, %v1646, 0
        %1670 = vmatprep.subr.bf16.mxu0 0
        %1671 = vmatpush1.bf16.msra.mxu0 %v1663
        %1672 = vmatprep.subr.bf16.mxu0 0
        %1673 = vmatpush1.bf16.msra.mxu0 %v1664
        %1674 = vmatprep.subr.bf16.mxu0 0
        %1675 = vmatpush1.bf16.msra.mxu0 0
        %1676 = vmatprep.subr.bf16.mxu0 0
        %1677 = vmatpush1.bf16.msra.mxu0 0
        %1678 = vmatprep.subr.bf16.mxu0 0
        %1679 = vmatpush1.bf16.msra.mxu0 0
        %1680 = vmatprep.subr.bf16.mxu0 0
        %1681 = vmatpush1.bf16.msra.mxu0 0
        %1682 = vmatprep.subr.bf16.mxu0 0
        %1683 = vmatpush1.bf16.msra.mxu0 0
        %1684 = vmatprep.subr.bf16.mxu0 0
        %1685 = vmatpush1.bf16.msra.mxu0 0
        %1686 = vmatprep.subr.bf16.mxu0 0
        %1687 = vmatpush1.bf16.msra.mxu0 0
        %1688 = vmatprep.subr.bf16.mxu0 0
        %1689 = vmatpush1.bf16.msra.mxu0 0
        %1690 = vmatprep.subr.bf16.mxu0 0
        %1691 = vmatpush1.bf16.msra.mxu0 0
        %1692 = vmatprep.subr.bf16.mxu0 0
        %1693 = vmatpush1.bf16.msra.mxu0 0
        %1694 = vmatprep.subr.bf16.mxu0 0
        %1695 = vmatpush1.bf16.msra.mxu0 0
        %1696 = vmatprep.subr.bf16.mxu0 0
        %1697 = vmatpush1.bf16.msra.mxu0 0
        %1698 = vmatprep.subr.bf16.mxu0 0
        %1699 = vmatpush1.bf16.msra.mxu0 0
        %1700 = vmatprep.subr.bf16.mxu0 0
        %1701 = vmatpush1.bf16.msra.mxu0 0
        %1702 = vmatprep.mubr.bf16.mxu0 0
        %1703 = vmatmul.mubr.bf16.gmra.mrb[0].mxu0 %v1668
        %v1704 = vpop.f32.mrb[0].mxu0
        %v1705 = vadd.f32 %v1654, %v1704
        %v1706 = vpop.f32.mrb[0].mxu0
        %v1707 = vpop.f32.mrb[0].mxu0
        %v1708 = vpop.f32.mrb[0].mxu0
        %1709 = vdwg.mxu0
        %v1710 = vpack.c.bf16 %v1705, %v1705
        %vm1711 = vcmask 257024
        %1712 = vst.msk [vmem:[%s664] sm:$0xf] %vm1711, %v1710
        %s1713 = sand.u32 %s381, 1
        %s1714 = scalar_lea.sflag [#allocation4], %s1713
        %s1715 = sand.u32 %s381, 1
        %s1716 = smul.addr %s1715, 4
        %s1717 = scalar_lea.vmem [#allocation16], %s1716
        // Predicated region
        $region113: #{tpu_custom_call.1} parent=79 // pred_check
          %p1718 = pneg %p391
        $region114: #{tpu_custom_call.1} parent=79 // pred_check_branch
          %1720 = sbr.rel (%p1718) target = $region116
        $region115: #{tpu_custom_call.1} parent=79 // pred_region
          %s1722 = ssub.s32 64, 64
          %1723 = vsyncadd %s1714, %s1722
          %s1724 = smul.addr %s38, 64
          %s1725 = scalar_lea.hbm %s15, %s1724
          %s1727 = sshll.u32 %s1717, 4
          %s1728 = int_to_ptr.vmem [resolvable:$true] %s1727
          %1730 = dma.vmem_to_hbm [thread:$0]  %s1728, 64, %s1725, %s1714
        $region116: #{tpu_custom_call.1} parent=79 // pred_fallthru
          _
      $region80: #{tpu_custom_call.1} parent=5 // pred_fallthru
        _
      %p1731 = scmp.le.s32.totalorder 2, %s33
      // Predicated region
      $region117: #{tpu_custom_call.1} parent=5 // pred_check
        %p1732 = pneg %p1731
      $region118: #{tpu_custom_call.1} parent=5 // pred_check_branch
        %1734 = sbr.rel (%p1732) target = $region120
      $region119: #{tpu_custom_call.1} parent=5 // pred_region
        %s1735 = ssub.s32 %s33, 2
        // Predicated region
        $region121: #{tpu_custom_call.1} parent=119 // pred_check
          %p1736 = pneg %p397
        $region122: #{tpu_custom_call.1} parent=119 // pred_check_branch
          %1738 = sbr.rel (%p1736) target = $region124
        $region123: #{tpu_custom_call.1} parent=119 // pred_region
          %s1739 = sand.u32 %s382, 1
          %s1740 = scalar_lea.sflag [#allocation4], %s1739
          %s1741 = sand.u32 %s382, 1
          %s1742 = smul.addr %s1741, 4
          %s1743 = scalar_lea.vmem [#allocation16], %s1742
          %1744 = dma.done %s1740, 64
        $region124: #{tpu_custom_call.1} parent=119 // pred_fallthru
          _
      $region120: #{tpu_custom_call.1} parent=5 // pred_fallthru
        _
    $region6: #{tpu_custom_call.1} parent=1 // loop_footer
      %s37 = sadd.s32 1, %s33
    $region7: #{tpu_custom_call.1} parent=1 // loop_footer_branch
      %32 = sbr.rel target = $region3
    $region8: #{tpu_custom_call.1} parent=1 // loop_exit
      _
    %1745 = vsyncpa [#allocation3], 1
    %s1746 = scalar_lea.sflag [#allocation3], 1
    %1747 = vsyncpa %s1746, 1
    %1748 = vsyncpa [#allocation6], 1
    %s1749 = scalar_lea.sflag [#allocation6], 1
    %1750 = vsyncpa %s1749, 1
    %1751 = vsyncpa [#allocation9], 1
    %1752 = vsyncpa [#allocation12], 1
    %1753 = vsyncpa [#allocation15], 1
    %1754 = vsyncpa [#allocation4], 1
    %s1755 = scalar_lea.sflag [#allocation4], 1
    %1756 = vsyncpa %s1755, 1

</llo_original>
